<compile_context>
chip_gen: v7x
topology: tpu7x:2x2x1
jax: 0.10.0
libtpu: 0.0.40
codegen_flags: <defaults>
</compile_context>

<pallas_src>
import functools
import math

import jax
import jax.numpy as jnp
from jax import lax
from jax.experimental import pallas as pl
from jax.experimental.pallas import tpu as pltpu


_NEG = -1e30   # finite stand-in for -inf in max-pool padding (avoids inf*0 NaNs)


def _silu(y):
    # y * sigmoid(y); the reciprocal goes to the EUP slot instead of a VALU divide.
    return y * pl.reciprocal(1.0 + jnp.exp(-y), approx=True)


def _make_adown_kernel(*, tro, wo, wh, cin, fuse):
    """Fused ADown kernel for one (batch, output-row-tile) grid step.

    Kernel inputs (column-deinterleaved NHWC rows, see adown_forward):
      xm_ref: (2, 2*tro, wh, c1)  main raw rows          [col-parity, row, col/2, ch]
      xh_ref: (2, 2,     wh, c1)  2-row halo below the tile
      ve_ref: (1, tro+1, 1, 1)    validity of even-parity avg-pool rows (int32)
      vo_ref: (1, tro,   1, 1)    validity of odd-parity  avg-pool rows (int32)
    """

    def _patches(xm_ref, xh_ref, ve_ref, vo_ref):
        xall = jnp.concatenate([xm_ref[...], xh_ref[...]], axis=1)  # (2, 2*tro+2, wh, c1)
        c1 = xall.shape[-1]
        xr = xall.reshape(2, tro + 1, 2, wh, c1)      # split raw rows into even/odd
        ce_re = xr[0, :, 0]    # even cols, even rows    (tro+1, wh, c1)
        ce_ro = xr[0, :, 1]    # even cols, odd  rows
        co_re = xr[1, :, 0]    # odd  cols, even rows
        co_ro = xr[1, :, 1]    # odd  cols, odd  rows

        # 2x2 stride-1 average pool, split by (avg-row parity, avg-col parity).
        ap_re_ce = (ce_re + ce_ro + co_re + co_ro) * 0.25                    # (tro+1, wh,   c1)
        ap_re_co = (co_re[:, :-1] + co_ro[:, :-1]
                    + ce_re[:, 1:] + ce_ro[:, 1:]) * 0.25                    # (tro+1, wh-1, c1)
        ap_ro_ce = (ce_ro[:-1] + co_ro[:-1] + ce_re[1:] + co_re[1:]) * 0.25  # (tro,   wh,   c1)
        ap_ro_co = (co_ro[:-1, :-1] + co_re[1:, :-1]
                    + ce_ro[:-1, 1:] + ce_re[1:, 1:]) * 0.25                 # (tro,   wh-1, c1)

        valid_e = ve_ref[0] != 0     # (tro+1, 1, 1)
        valid_o = vo_ref[0] != 0     # (tro,   1, 1)

        def branch(ch_lo, ch_hi, fill):
            ch = ch_hi - ch_lo
            b_re_ce = jnp.where(valid_e, ap_re_ce[..., ch_lo:ch_hi], fill)
            b_re_co = jnp.where(valid_e, ap_re_co[..., ch_lo:ch_hi], fill)
            b_ro_ce = jnp.where(valid_o, ap_ro_ce[..., ch_lo:ch_hi], fill)
            b_ro_co = jnp.where(valid_o, ap_ro_co[..., ch_lo:ch_hi], fill)

            def cols(x_ce, x_co):
                # 3x3/s2/p1 window columns kw = 0, 1, 2 for every output column.
                pad = jnp.full((x_ce.shape[0], 1, ch), fill, x_ce.dtype)
                w0 = jnp.concatenate([pad, x_co[:, :wo - 1]], axis=1)
                w1 = x_ce[:, :wo]
                if x_co.shape[1] >= wo:                      # W odd: enough odd columns
                    w2 = x_co[:, :wo]
                else:                                        # W even: right pad column
                    w2 = jnp.concatenate([x_co, pad], axis=1)
                return w0, w1, w2

            e0, e1, e2 = cols(b_re_ce, b_re_co)   # even avg-rows (kh = 0 and 2)
            o0, o1, o2 = cols(b_ro_ce, b_ro_co)   # odd  avg-rows (kh = 1)
            # window (kh, kw) for local output row t uses avg-pool row 2t + kh
            return [e0[:tro], e1[:tro], e2[:tro],
                    o0, o1, o2,
                    e0[1:], e1[1:], e2[1:]]       # 9 x (tro, wo, ch)

        conv_win = branch(0, cin, 0.0)            # zero padding for the conv branch
        max_win = branch(cin, 2 * cin, _NEG)      # -inf-ish padding for the max-pool
        m2 = functools.reduce(jnp.maximum, max_win)          # (tro, wo, cin)
        return conv_win, m2

    if fuse:
        # One MXU pass: A = [im2col(cv1) | maxpool(cv2)], W = blockdiag(w1, w2)
        def kernel(xm_ref, xh_ref, ve_ref, vo_ref, w_ref, b_ref, o_ref):
            conv_win, m2 = _patches(xm_ref, xh_ref, ve_ref, vo_ref)
            a = jnp.concatenate(conv_win + [m2], axis=-1)     # (tro, wo, 10*cin)
            a = a.reshape(tro * wo, 10 * cin).astype(w_ref.dtype)
            y = jnp.dot(a, w_ref[...], preferred_element_type=jnp.float32)
            y = _silu(y + b_ref[...])                         # f32 bias + SiLU
            o_ref[0] = y.astype(o_ref.dtype)                  # lane-dense (M, 2*cout)
    else:
        # Large cout: keep the two GEMMs separate (no block-diagonal MXU waste).
        def kernel(xm_ref, xh_ref, ve_ref, vo_ref, w1_ref, b1_ref, w2_ref, b2_ref, o_ref):
            conv_win, m2 = _patches(xm_ref, xh_ref, ve_ref, vo_ref)
            p1 = jnp.concatenate(conv_win, axis=-1)
            p1 = p1.reshape(tro * wo, 9 * cin).astype(w1_ref.dtype)
            m2 = m2.reshape(tro * wo, cin).astype(w2_ref.dtype)
            y1 = _silu(jnp.dot(p1, w1_ref[...], preferred_element_type=jnp.float32)
                       + b1_ref[...])
            y2 = _silu(jnp.dot(m2, w2_ref[...], preferred_element_type=jnp.float32)
                       + b2_ref[...])
            o_ref[0] = jnp.concatenate([y1, y2], axis=-1).astype(o_ref.dtype)

    return kernel


# --------------------------------- wrapper ---------------------------------- #

def adown_forward(x_nchw, params, *, mxu_dtype=jnp.bfloat16, tile_rows=None):
    """ADown forward.  x_nchw: (B, C1, H, W)  ->  (B, C2, Ho, Wo), NCHW."""
    w1m, b1 = params["w1m"], params["b1"]
    w2m, b2 = params["w2m"], params["b2"]

    B, C1, H, W = x_nchw.shape
    cin = C1 // 2
    cout = w1m.shape[1]
    hp, wp = H - 1, W - 1                    # after avg_pool2d(2, 1)
    ho = (hp - 1) // 2 + 1                   # after k=3, s=2, p=1
    wo = (wp - 1) // 2 + 1
    wh = (W + 1) // 2                        # column-deinterleaved half width
    out_dtype = x_nchw.dtype
    cdt = jnp.dtype(mxu_dtype)

    # -- output-row tile: keep the double-buffered input block a few MiB ------
    if tile_rows is None:
        per_row = 4 * wh * C1 * cdt.itemsize             # raw input bytes / output row
        tile_rows = max(1, (2 * 1024 * 1024) // max(per_row, 1))
    tro = int(min(tile_rows, ho))
    if tro < ho:                                         # keep tro*wo a multiple of 8
        mlt = 8 // math.gcd(wo, 8)
        tro = (tro // mlt) * mlt or ho
    ntile = -(-ho // tro)
    hpad = 2 * tro * ntile + 2

    # -- single XLA layout pass: NCHW -> padded, column-deinterleaved NHWC ----
    xt = jnp.transpose(x_nchw, (0, 2, 3, 1)).astype(cdt)          # (B, H, W, C1)
    xt = jnp.pad(xt, ((0, 0), (1, hpad - H - 1), (0, 2 * wh - W), (0, 0)))
    x_eo = (xt.reshape(B, hpad, wh, 2, C1)
              .transpose(0, 3, 1, 2, 4)
              .reshape(B * 2, hpad, wh, C1))   # row 2b+p = column-parity p of batch b

    # -- per-tile avg-pool-row validity masks (tiny, SMEM-sized side inputs) --
    r_off = (jnp.arange(ntile, dtype=jnp.int32) * tro)[:, None]
    ge = 2 * r_off + 2 * jnp.arange(tro + 1, dtype=jnp.int32)[None, :] - 1
    go = 2 * r_off + 2 * jnp.arange(tro, dtype=jnp.int32)[None, :]
    ve = ((ge >= 0) & (ge < hp)).astype(jnp.int32).reshape(ntile, tro + 1, 1, 1)
    vo = (go < hp).astype(jnp.int32).reshape(ntile, tro, 1, 1)

    fuse = (2 * cout) <= 128
    kernel = _make_adown_kernel(tro=tro, wo=wo, wh=wh, cin=cin, fuse=fuse)

    in_specs = [
        pl.BlockSpec((2, 2 * tro, wh, C1), lambda b, r: (b, r, 0, 0)),          # main rows
        pl.BlockSpec((2, 2, wh, C1), lambda b, r: (b, tro * (r + 1), 0, 0)),    # 2-row halo
        pl.BlockSpec((1, tro + 1, 1, 1), lambda b, r: (r, 0, 0, 0)),            # even-row mask
        pl.BlockSpec((1, tro, 1, 1), lambda b, r: (r, 0, 0, 0)),                # odd-row mask
    ]
    if fuse:
        wcat = jnp.zeros((10 * cin, 2 * cout), jnp.float32)
        wcat = wcat.at[:9 * cin, :cout].set(w1m).at[9 * cin:, cout:].set(w2m)
        bcat = jnp.concatenate([b1, b2]).reshape(1, 2 * cout).astype(jnp.float32)
        weights = (wcat.astype(cdt), bcat)
        in_specs += [
            pl.BlockSpec((10 * cin, 2 * cout), lambda b, r: (0, 0)),
            pl.BlockSpec((1, 2 * cout), lambda b, r: (0, 0)),
        ]
    else:
        weights = (w1m.astype(cdt), b1.reshape(1, cout).astype(jnp.float32),
                   w2m.astype(cdt), b2.reshape(1, cout).astype(jnp.float32))
        in_specs += [
            pl.BlockSpec((9 * cin, cout), lambda b, r: (0, 0)),
            pl.BlockSpec((1, cout), lambda b, r: (0, 0)),
            pl.BlockSpec((cin, cout), lambda b, r: (0, 0)),
            pl.BlockSpec((1, cout), lambda b, r: (0, 0)),
        ]

    out = pl.pallas_call(
        kernel,
        out_shape=jax.ShapeDtypeStruct((B, ho * wo, 2 * cout), out_dtype),
        grid=(B, ntile),
        in_specs=in_specs,
        out_specs=pl.BlockSpec((1, tro * wo, 2 * cout), lambda b, r: (b, r, 0)),
        compiler_params=pltpu.CompilerParams(
            dimension_semantics=("parallel", "parallel"),
            vmem_limit_bytes=48 * 1024 * 1024),
    )(x_eo, x_eo, ve, vo, *weights)

    out = out.reshape(B, ho, wo, 2 * cout)               # lane-dense [cv1 | cv2]
    return jnp.transpose(out, (0, 3, 1, 2))              # -> NCHW


# ------------------------- parameters (deterministic) ----------------------- #

def init_params(key, c1, c2, dtype=jnp.float32):
    c = c2 // 2
    cin = c1 // 2
    eps = 1e-5
    ks = jax.random.split(key, 10)

    # cv1 = Conv2d(cin, c, 3, s=2, p=1, bias=False) + BN(c) + SiLU
    w1 = 0.1 * jax.random.normal(ks[0], (c, cin, 3, 3), dtype)
    g1 = 1.0 + 0.1 * jax.random.normal(ks[1], (c,), dtype)
    be1 = 0.1 * jax.random.normal(ks[2], (c,), dtype)
    mu1 = 0.1 * jax.random.normal(ks[3], (c,), dtype)
    var1 = jnp.abs(jax.random.normal(ks[4], (c,), dtype)) + 0.5
    s1 = g1 / jnp.sqrt(var1 + eps)
    w1_eff = w1 * s1[:, None, None, None]
    b1_eff = be1 - mu1 * s1

    # cv2 = Conv2d(cin, c, 1, s=1, p=0, bias=False) + BN(c) + SiLU
    w2 = 0.1 * jax.random.normal(ks[5], (c, cin, 1, 1), dtype)
    g2 = 1.0 + 0.1 * jax.random.normal(ks[6], (c,), dtype)
    be2 = 0.1 * jax.random.normal(ks[7], (c,), dtype)
    mu2 = 0.1 * jax.random.normal(ks[8], (c,), dtype)
    var2 = jnp.abs(jax.random.normal(ks[9], (c,), dtype)) + 0.5
    s2 = g2 / jnp.sqrt(var2 + eps)
    w2_eff = w2 * s2[:, None, None, None]
    b2_eff = be2 - mu2 * s2

    return dict(
        w1_eff=w1_eff, b1=b1_eff, w2_eff=w2_eff, b2=b2_eff,
        # GEMM layouts: row index = (kh*3 + kw)*cin + c (matches in-kernel patch order)
        w1m=jnp.transpose(w1_eff, (2, 3, 1, 0)).reshape(9 * cin, c),
        w2m=w2_eff[:, :, 0, 0].T,                          # (cin, c)
    )


# ------------------------------ pure-JAX reference -------------------------- #

def adown_reference(x_nchw, params):
    dt = x_nchw.dtype
    ap = lax.reduce_window(x_nchw, jnp.array(0.0, dt), lax.add,
                           (1, 1, 2, 2), (1, 1, 1, 1), "VALID") * 0.25
    cin = x_nchw.shape[1] // 2
    x1, x2 = ap[:, :cin], ap[:, cin:]

    y1 = lax.conv_general_dilated(x1, params["w1_eff"], (2, 2), ((1, 1), (1, 1)),
                                  dimension_numbers=("NCHW", "OIHW", "NCHW"))
    y1 = y1 + params["b1"].reshape(1, -1, 1, 1)
    y1 = y1 * jax.nn.sigmoid(y1)

    x2m = lax.reduce_window(x2, jnp.array(-jnp.inf, dt), lax.max,
                            (1, 1, 3, 3), (1, 1, 2, 2),
                            ((0, 0), (0, 0), (1, 1), (1, 1)))
    y2 = lax.conv_general_dilated(x2m, params["w2_eff"], (1, 1), ((0, 0), (0, 0)),
                                  dimension_numbers=("NCHW", "OIHW", "NCHW"))
    y2 = y2 + params["b2"].reshape(1, -1, 1, 1)
    y2 = y2 * jax.nn.sigmoid(y2)

    return jnp.concatenate([y1, y2], axis=1)


# ---------------------------------- main ------------------------------------ #

if __name__ == "__main__":
    key = jax.random.PRNGKey(0)
    kx, kp, kx2, kp2 = jax.random.split(key, 4)

    # -- test 1: fused-GEMM path (2*cout <= 128), f32 MXU and bf16 MXU --------
    B, C1, H, W, C2 = 2, 4, 16, 16, 8
    x = jax.random.normal(kx, (B, C1, H, W), jnp.float32)
    params = init_params(kp, C1, C2)
    ref = adown_reference(x, params)
    ho = ((H - 1) - 1) // 2 + 1
    assert ref.shape == (B, C2, ho, ho)

    fwd_f32 = jax.jit(functools.partial(adown_forward, mxu_dtype=jnp.float32))
    out_f32 = jax.block_until_ready(fwd_f32(x, params))
    assert out_f32.shape == ref.shape, out_f32.shape
    assert jnp.allclose(out_f32, ref, rtol=1e-2, atol=1e-2), \
        float(jnp.max(jnp.abs(out_f32 - ref)))

    fwd_bf16 = jax.jit(functools.partial(adown_forward, mxu_dtype=jnp.bfloat16))
    out_bf16 = jax.block_until_ready(fwd_bf16(x, params))
    assert jnp.allclose(out_bf16, ref, rtol=3e-2, atol=3e-2), \
        float(jnp.max(jnp.abs(out_bf16 - ref)))

    # -- test 2: odd spatial size, partial last row tile, two-GEMM path -------
    B2, C12, H2, W2, C22 = 1, 8, 17, 17, 288
    x2 = jax.random.normal(kx2, (B2, C12, H2, W2), jnp.float32)
    params2 = init_params(kp2, C12, C22)
    ref2 = adown_reference(x2, params2)
    fwd2 = jax.jit(functools.partial(adown_forward, mxu_dtype=jnp.float32, tile_rows=3))
    out2 = jax.block_until_ready(fwd2(x2, params2))
    assert out2.shape == ref2.shape, out2.shape
    assert jnp.allclose(out2, ref2, rtol=1e-2, atol=1e-2), \
        float(jnp.max(jnp.abs(out2 - ref2)))

    print("KERNEL_OK")
</pallas_src>

<mosaic_0001>
module attributes {stable_mosaic.version = 11 : i64} {
  func.func @kernel(%arg0: i32, %arg1: i32, %arg2: memref<2x16x8x4xf32, #tpu.memory_space<vmem>>, %arg3: memref<2x2x8x4xf32, #tpu.memory_space<vmem>>, %arg4: memref<1x9x1x1xi32, #tpu.memory_space<vmem>>, %arg5: memref<1x8x1x1xi32, #tpu.memory_space<vmem>>, %arg6: memref<20x8xf32, #tpu.memory_space<vmem>>, %arg7: memref<1x8xf32, #tpu.memory_space<vmem>>, %arg8: memref<1x64x8xf32, #tpu.memory_space<vmem>>) attributes {dimension_semantics = [#tpu.dimension_semantics<parallel>, #tpu.dimension_semantics<parallel>], iteration_bounds = array<i64: 2, 1>, scalar_prefetch = 0 : i64, scratch_operands = 0 : i64, tpu.core_type = #tpu.core_type<tc>, window_params = [{transform_indices = @transform_0, window_bounds = array<i64: 2, 16, 8, 4>}, {transform_indices = @transform_1, window_bounds = array<i64: 2, 2, 8, 4>}, {transform_indices = @transform_2, window_bounds = array<i64: 1, 9, 1, 1>}, {transform_indices = @transform_3, window_bounds = array<i64: 1, 8, 1, 1>}, {pipeline_mode = #tpu.pipeline_mode<synchronous>, transform_indices = @transform_4, window_bounds = array<i64: 20, 8>}, {pipeline_mode = #tpu.pipeline_mode<synchronous>, transform_indices = @transform_5, window_bounds = array<i64: 1, 8>}, {transform_indices = @transform_6, window_bounds = array<i64: 1, 64, 8>}]} {
    %c0 = arith.constant 0 : index
    %c0_0 = arith.constant 0 : index
    %c0_1 = arith.constant 0 : index
    %c0_2 = arith.constant 0 : index
    %0 = vector.load %arg2[%c0, %c0_0, %c0_1, %c0_2] : memref<2x16x8x4xf32, #tpu.memory_space<vmem>>, vector<2x16x8x4xf32>
    %c0_3 = arith.constant 0 : index
    %c0_4 = arith.constant 0 : index
    %c0_5 = arith.constant 0 : index
    %c0_6 = arith.constant 0 : index
    %1 = vector.load %arg3[%c0_3, %c0_4, %c0_5, %c0_6] : memref<2x2x8x4xf32, #tpu.memory_space<vmem>>, vector<2x2x8x4xf32>
    %2 = tpu.concatenate %0, %1 in 1 : vector<2x16x8x4xf32>, vector<2x2x8x4xf32> -> vector<2x18x8x4xf32>
    %3 = vector.shape_cast %2 : vector<2x18x8x4xf32> to vector<2x9x2x8x4xf32>
    %4 = vector.extract_strided_slice %3 {offsets = [0, 0, 0, 0, 0], sizes = [1, 9, 1, 8, 4], strides = [1, 1, 1, 1, 1]} : vector<2x9x2x8x4xf32> to vector<1x9x1x8x4xf32>
    %5 = vector.shape_cast %4 : vector<1x9x1x8x4xf32> to vector<9x8x4xf32>
    %6 = vector.extract_strided_slice %3 {offsets = [0, 0, 1, 0, 0], sizes = [1, 9, 1, 8, 4], strides = [1, 1, 1, 1, 1]} : vector<2x9x2x8x4xf32> to vector<1x9x1x8x4xf32>
    %7 = vector.shape_cast %6 : vector<1x9x1x8x4xf32> to vector<9x8x4xf32>
    %8 = vector.extract_strided_slice %3 {offsets = [1, 0, 0, 0, 0], sizes = [1, 9, 1, 8, 4], strides = [1, 1, 1, 1, 1]} : vector<2x9x2x8x4xf32> to vector<1x9x1x8x4xf32>
    %9 = vector.shape_cast %8 : vector<1x9x1x8x4xf32> to vector<9x8x4xf32>
    %10 = vector.extract_strided_slice %3 {offsets = [1, 0, 1, 0, 0], sizes = [1, 9, 1, 8, 4], strides = [1, 1, 1, 1, 1]} : vector<2x9x2x8x4xf32> to vector<1x9x1x8x4xf32>
    %11 = vector.shape_cast %10 : vector<1x9x1x8x4xf32> to vector<9x8x4xf32>
    %12 = arith.addf %5, %7 : vector<9x8x4xf32>
    %13 = arith.addf %12, %9 : vector<9x8x4xf32>
    %14 = arith.addf %13, %11 : vector<9x8x4xf32>
    %cst = arith.constant 2.500000e-01 : f32
    %15 = vector.broadcast %cst : f32 to vector<9x8x4xf32>
    %16 = arith.mulf %14, %15 : vector<9x8x4xf32>
    %17 = vector.extract_strided_slice %9 {offsets = [0, 0, 0], sizes = [9, 7, 4], strides = [1, 1, 1]} : vector<9x8x4xf32> to vector<9x7x4xf32>
    %18 = vector.extract_strided_slice %11 {offsets = [0, 0, 0], sizes = [9, 7, 4], strides = [1, 1, 1]} : vector<9x8x4xf32> to vector<9x7x4xf32>
    %19 = arith.addf %17, %18 : vector<9x7x4xf32>
    %20 = vector.extract_strided_slice %5 {offsets = [0, 1, 0], sizes = [9, 7, 4], strides = [1, 1, 1]} : vector<9x8x4xf32> to vector<9x7x4xf32>
    %21 = arith.addf %19, %20 : vector<9x7x4xf32>
    %22 = vector.extract_strided_slice %7 {offsets = [0, 1, 0], sizes = [9, 7, 4], strides = [1, 1, 1]} : vector<9x8x4xf32> to vector<9x7x4xf32>
    %23 = arith.addf %21, %22 : vector<9x7x4xf32>
    %cst_7 = arith.constant 2.500000e-01 : f32
    %24 = vector.broadcast %cst_7 : f32 to vector<9x7x4xf32>
    %25 = arith.mulf %23, %24 : vector<9x7x4xf32>
    %26 = vector.extract_strided_slice %7 {offsets = [0, 0, 0], sizes = [8, 8, 4], strides = [1, 1, 1]} : vector<9x8x4xf32> to vector<8x8x4xf32>
    %27 = vector.extract_strided_slice %11 {offsets = [0, 0, 0], sizes = [8, 8, 4], strides = [1, 1, 1]} : vector<9x8x4xf32> to vector<8x8x4xf32>
    %28 = arith.addf %26, %27 : vector<8x8x4xf32>
    %29 = vector.extract_strided_slice %5 {offsets = [1, 0, 0], sizes = [8, 8, 4], strides = [1, 1, 1]} : vector<9x8x4xf32> to vector<8x8x4xf32>
    %30 = arith.addf %28, %29 : vector<8x8x4xf32>
    %31 = vector.extract_strided_slice %9 {offsets = [1, 0, 0], sizes = [8, 8, 4], strides = [1, 1, 1]} : vector<9x8x4xf32> to vector<8x8x4xf32>
    %32 = arith.addf %30, %31 : vector<8x8x4xf32>
    %cst_8 = arith.constant 2.500000e-01 : f32
    %33 = vector.broadcast %cst_8 : f32 to vector<8x8x4xf32>
    %34 = arith.mulf %32, %33 : vector<8x8x4xf32>
    %35 = vector.extract_strided_slice %11 {offsets = [0, 0, 0], sizes = [8, 7, 4], strides = [1, 1, 1]} : vector<9x8x4xf32> to vector<8x7x4xf32>
    %36 = vector.extract_strided_slice %9 {offsets = [1, 0, 0], sizes = [8, 7, 4], strides = [1, 1, 1]} : vector<9x8x4xf32> to vector<8x7x4xf32>
    %37 = arith.addf %35, %36 : vector<8x7x4xf32>
    %38 = vector.extract_strided_slice %7 {offsets = [0, 1, 0], sizes = [8, 7, 4], strides = [1, 1, 1]} : vector<9x8x4xf32> to vector<8x7x4xf32>
    %39 = arith.addf %37, %38 : vector<8x7x4xf32>
    %40 = vector.extract_strided_slice %5 {offsets = [1, 1, 0], sizes = [8, 7, 4], strides = [1, 1, 1]} : vector<9x8x4xf32> to vector<8x7x4xf32>
    %41 = arith.addf %39, %40 : vector<8x7x4xf32>
    %cst_9 = arith.constant 2.500000e-01 : f32
    %42 = vector.broadcast %cst_9 : f32 to vector<8x7x4xf32>
    %43 = arith.mulf %41, %42 : vector<8x7x4xf32>
    %c0_10 = arith.constant 0 : index
    %c0_11 = arith.constant 0 : index
    %c0_12 = arith.constant 0 : index
    %c0_13 = arith.constant 0 : index
    %44 = vector.load %arg4[%c0_10, %c0_11, %c0_12, %c0_13] : memref<1x9x1x1xi32, #tpu.memory_space<vmem>>, vector<1x9x1x1xi32>
    %45 = vector.shape_cast %44 : vector<1x9x1x1xi32> to vector<9x1x1xi32>
    %c0_i32 = arith.constant 0 : i32
    %46 = vector.broadcast %c0_i32 : i32 to vector<9x1x1xi32>
    %47 = arith.cmpi ne, %45, %46 : vector<9x1x1xi32>
    %c0_14 = arith.constant 0 : index
    %c0_15 = arith.constant 0 : index
    %c0_16 = arith.constant 0 : index
    %c0_17 = arith.constant 0 : index
    %48 = vector.load %arg5[%c0_14, %c0_15, %c0_16, %c0_17] : memref<1x8x1x1xi32, #tpu.memory_space<vmem>>, vector<1x8x1x1xi32>
    %49 = vector.shape_cast %48 : vector<1x8x1x1xi32> to vector<8x1x1xi32>
    %c0_i32_18 = arith.constant 0 : i32
    %50 = vector.broadcast %c0_i32_18 : i32 to vector<8x1x1xi32>
    %51 = arith.cmpi ne, %49, %50 : vector<8x1x1xi32>
    %52 = vector.extract_strided_slice %16 {offsets = [0, 0, 0], sizes = [9, 8, 2], strides = [1, 1, 1]} : vector<9x8x4xf32> to vector<9x8x2xf32>
    %cst_19 = arith.constant 0.000000e+00 : f32
    %53 = vector.shape_cast %47 : vector<9x1x1xi1> to vector<9x1x1xi1>
    %54 = vector.broadcast %53 : vector<9x1x1xi1> to vector<9x8x2xi1>
    %55 = vector.broadcast %cst_19 : f32 to vector<9x8x2xf32>
    %56 = arith.select %54, %52, %55 : vector<9x8x2xi1>, vector<9x8x2xf32>
    %57 = vector.extract_strided_slice %25 {offsets = [0, 0, 0], sizes = [9, 7, 2], strides = [1, 1, 1]} : vector<9x7x4xf32> to vector<9x7x2xf32>
    %cst_20 = arith.constant 0.000000e+00 : f32
    %58 = vector.shape_cast %47 : vector<9x1x1xi1> to vector<9x1x1xi1>
    %59 = vector.broadcast %58 : vector<9x1x1xi1> to vector<9x7x2xi1>
    %60 = vector.broadcast %cst_20 : f32 to vector<9x7x2xf32>
    %61 = arith.select %59, %57, %60 : vector<9x7x2xi1>, vector<9x7x2xf32>
    %62 = vector.extract_strided_slice %34 {offsets = [0, 0, 0], sizes = [8, 8, 2], strides = [1, 1, 1]} : vector<8x8x4xf32> to vector<8x8x2xf32>
    %cst_21 = arith.constant 0.000000e+00 : f32
    %63 = vector.shape_cast %51 : vector<8x1x1xi1> to vector<8x1x1xi1>
    %64 = vector.broadcast %63 : vector<8x1x1xi1> to vector<8x8x2xi1>
    %65 = vector.broadcast %cst_21 : f32 to vector<8x8x2xf32>
    %66 = arith.select %64, %62, %65 : vector<8x8x2xi1>, vector<8x8x2xf32>
    %67 = vector.extract_strided_slice %43 {offsets = [0, 0, 0], sizes = [8, 7, 2], strides = [1, 1, 1]} : vector<8x7x4xf32> to vector<8x7x2xf32>
    %cst_22 = arith.constant 0.000000e+00 : f32
    %68 = vector.shape_cast %51 : vector<8x1x1xi1> to vector<8x1x1xi1>
    %69 = vector.broadcast %68 : vector<8x1x1xi1> to vector<8x7x2xi1>
    %70 = vector.broadcast %cst_22 : f32 to vector<8x7x2xf32>
    %71 = arith.select %69, %67, %70 : vector<8x7x2xi1>, vector<8x7x2xf32>
    %cst_23 = arith.constant 0.000000e+00 : f32
    %72 = vector.broadcast %cst_23 : f32 to vector<9x1x2xf32>
    %73 = tpu.concatenate %72, %61 in 1 : vector<9x1x2xf32>, vector<9x7x2xf32> -> vector<9x8x2xf32>
    %74 = tpu.concatenate %61, %72 in 1 : vector<9x7x2xf32>, vector<9x1x2xf32> -> vector<9x8x2xf32>
    %cst_24 = arith.constant 0.000000e+00 : f32
    %75 = vector.broadcast %cst_24 : f32 to vector<8x1x2xf32>
    %76 = tpu.concatenate %75, %71 in 1 : vector<8x1x2xf32>, vector<8x7x2xf32> -> vector<8x8x2xf32>
    %77 = tpu.concatenate %71, %75 in 1 : vector<8x7x2xf32>, vector<8x1x2xf32> -> vector<8x8x2xf32>
    %78 = vector.extract_strided_slice %73 {offsets = [0, 0, 0], sizes = [8, 8, 2], strides = [1, 1, 1]} : vector<9x8x2xf32> to vector<8x8x2xf32>
    %79 = vector.extract_strided_slice %56 {offsets = [0, 0, 0], sizes = [8, 8, 2], strides = [1, 1, 1]} : vector<9x8x2xf32> to vector<8x8x2xf32>
    %80 = vector.extract_strided_slice %74 {offsets = [0, 0, 0], sizes = [8, 8, 2], strides = [1, 1, 1]} : vector<9x8x2xf32> to vector<8x8x2xf32>
    %81 = vector.extract_strided_slice %73 {offsets = [1, 0, 0], sizes = [8, 8, 2], strides = [1, 1, 1]} : vector<9x8x2xf32> to vector<8x8x2xf32>
    %82 = vector.extract_strided_slice %56 {offsets = [1, 0, 0], sizes = [8, 8, 2], strides = [1, 1, 1]} : vector<9x8x2xf32> to vector<8x8x2xf32>
    %83 = vector.extract_strided_slice %74 {offsets = [1, 0, 0], sizes = [8, 8, 2], strides = [1, 1, 1]} : vector<9x8x2xf32> to vector<8x8x2xf32>
    %84 = vector.extract_strided_slice %16 {offsets = [0, 0, 2], sizes = [9, 8, 2], strides = [1, 1, 1]} : vector<9x8x4xf32> to vector<9x8x2xf32>
    %cst_25 = arith.constant -1.000000e+30 : f32
    %85 = vector.shape_cast %47 : vector<9x1x1xi1> to vector<9x1x1xi1>
    %86 = vector.broadcast %85 : vector<9x1x1xi1> to vector<9x8x2xi1>
    %87 = vector.broadcast %cst_25 : f32 to vector<9x8x2xf32>
    %88 = arith.select %86, %84, %87 : vector<9x8x2xi1>, vector<9x8x2xf32>
    %89 = vector.extract_strided_slice %25 {offsets = [0, 0, 2], sizes = [9, 7, 2], strides = [1, 1, 1]} : vector<9x7x4xf32> to vector<9x7x2xf32>
    %cst_26 = arith.constant -1.000000e+30 : f32
    %90 = vector.shape_cast %47 : vector<9x1x1xi1> to vector<9x1x1xi1>
    %91 = vector.broadcast %90 : vector<9x1x1xi1> to vector<9x7x2xi1>
    %92 = vector.broadcast %cst_26 : f32 to vector<9x7x2xf32>
    %93 = arith.select %91, %89, %92 : vector<9x7x2xi1>, vector<9x7x2xf32>
    %94 = vector.extract_strided_slice %34 {offsets = [0, 0, 2], sizes = [8, 8, 2], strides = [1, 1, 1]} : vector<8x8x4xf32> to vector<8x8x2xf32>
    %cst_27 = arith.constant -1.000000e+30 : f32
    %95 = vector.shape_cast %51 : vector<8x1x1xi1> to vector<8x1x1xi1>
    %96 = vector.broadcast %95 : vector<8x1x1xi1> to vector<8x8x2xi1>
    %97 = vector.broadcast %cst_27 : f32 to vector<8x8x2xf32>
    %98 = arith.select %96, %94, %97 : vector<8x8x2xi1>, vector<8x8x2xf32>
    %99 = vector.extract_strided_slice %43 {offsets = [0, 0, 2], sizes = [8, 7, 2], strides = [1, 1, 1]} : vector<8x7x4xf32> to vector<8x7x2xf32>
    %cst_28 = arith.constant -1.000000e+30 : f32
    %100 = vector.shape_cast %51 : vector<8x1x1xi1> to vector<8x1x1xi1>
    %101 = vector.broadcast %100 : vector<8x1x1xi1> to vector<8x7x2xi1>
    %102 = vector.broadcast %cst_28 : f32 to vector<8x7x2xf32>
    %103 = arith.select %101, %99, %102 : vector<8x7x2xi1>, vector<8x7x2xf32>
    %cst_29 = arith.constant -1.000000e+30 : f32
    %104 = vector.broadcast %cst_29 : f32 to vector<9x1x2xf32>
    %105 = tpu.concatenate %104, %93 in 1 : vector<9x1x2xf32>, vector<9x7x2xf32> -> vector<9x8x2xf32>
    %106 = tpu.concatenate %93, %104 in 1 : vector<9x7x2xf32>, vector<9x1x2xf32> -> vector<9x8x2xf32>
    %cst_30 = arith.constant -1.000000e+30 : f32
    %107 = vector.broadcast %cst_30 : f32 to vector<8x1x2xf32>
    %108 = tpu.concatenate %107, %103 in 1 : vector<8x1x2xf32>, vector<8x7x2xf32> -> vector<8x8x2xf32>
    %109 = tpu.concatenate %103, %107 in 1 : vector<8x7x2xf32>, vector<8x1x2xf32> -> vector<8x8x2xf32>
    %110 = vector.extract_strided_slice %105 {offsets = [0, 0, 0], sizes = [8, 8, 2], strides = [1, 1, 1]} : vector<9x8x2xf32> to vector<8x8x2xf32>
    %111 = vector.extract_strided_slice %88 {offsets = [0, 0, 0], sizes = [8, 8, 2], strides = [1, 1, 1]} : vector<9x8x2xf32> to vector<8x8x2xf32>
    %112 = vector.extract_strided_slice %106 {offsets = [0, 0, 0], sizes = [8, 8, 2], strides = [1, 1, 1]} : vector<9x8x2xf32> to vector<8x8x2xf32>
    %113 = vector.extract_strided_slice %105 {offsets = [1, 0, 0], sizes = [8, 8, 2], strides = [1, 1, 1]} : vector<9x8x2xf32> to vector<8x8x2xf32>
    %114 = vector.extract_strided_slice %88 {offsets = [1, 0, 0], sizes = [8, 8, 2], strides = [1, 1, 1]} : vector<9x8x2xf32> to vector<8x8x2xf32>
    %115 = vector.extract_strided_slice %106 {offsets = [1, 0, 0], sizes = [8, 8, 2], strides = [1, 1, 1]} : vector<9x8x2xf32> to vector<8x8x2xf32>
    %116 = arith.maximumf %110, %111 : vector<8x8x2xf32>
    %117 = arith.maximumf %116, %112 : vector<8x8x2xf32>
    %118 = arith.maximumf %117, %108 : vector<8x8x2xf32>
    %119 = arith.maximumf %118, %98 : vector<8x8x2xf32>
    %120 = arith.maximumf %119, %109 : vector<8x8x2xf32>
    %121 = arith.maximumf %120, %113 : vector<8x8x2xf32>
    %122 = arith.maximumf %121, %114 : vector<8x8x2xf32>
    %123 = arith.maximumf %122, %115 : vector<8x8x2xf32>
    %124 = tpu.concatenate %78, %79, %80, %76, %66, %77, %81, %82, %83, %123 in 2 : vector<8x8x2xf32>, vector<8x8x2xf32>, vector<8x8x2xf32>, vector<8x8x2xf32>, vector<8x8x2xf32>, vector<8x8x2xf32>, vector<8x8x2xf32>, vector<8x8x2xf32>, vector<8x8x2xf32>, vector<8x8x2xf32> -> vector<8x8x20xf32>
    %125 = vector.shape_cast %124 : vector<8x8x20xf32> to vector<64x20xf32>
    %c0_31 = arith.constant 0 : index
    %c0_32 = arith.constant 0 : index
    %126 = vector.load %arg6[%c0_31, %c0_32] : memref<20x8xf32, #tpu.memory_space<vmem>>, vector<20x8xf32>
    %cst_33 = arith.constant dense<0.000000e+00> : vector<64x8xf32>
    %127 = tpu.matmul %125, %126, %cst_33 {dimension_numbers = #tpu.dot_dimension_numbers<[1], [0], [0], [1], [0, 0, 1, 1], [], []>} : vector<64x20xf32>, vector<20x8xf32>, vector<64x8xf32> -> vector<64x8xf32>
    %c0_34 = arith.constant 0 : index
    %c0_35 = arith.constant 0 : index
    %128 = vector.load %arg7[%c0_34, %c0_35] : memref<1x8xf32, #tpu.memory_space<vmem>>, vector<1x8xf32>
    %129 = vector.broadcast %128 : vector<1x8xf32> to vector<64x8xf32>
    %130 = arith.addf %127, %129 : vector<64x8xf32>
    %cst_36 = arith.constant 0.000000e+00 : f32
    %131 = vector.broadcast %cst_36 : f32 to vector<64x8xf32>
    %132 = arith.subf %131, %130 : vector<64x8xf32>
    %133 = math.exp %132 : vector<64x8xf32>
    %cst_37 = arith.constant 1.000000e+00 : f32
    %134 = vector.broadcast %cst_37 : f32 to vector<64x8xf32>
    %135 = arith.addf %134, %133 : vector<64x8xf32>
    %136 = tpu.reciprocal %135 {approx = true} : vector<64x8xf32> -> vector<64x8xf32>
    %137 = arith.mulf %130, %136 : vector<64x8xf32>
    %c0_38 = arith.constant 0 : index
    %c0_39 = arith.constant 0 : index
    %c0_40 = arith.constant 0 : index
    %138 = vector.load %arg8[%c0_38, %c0_39, %c0_40] : memref<1x64x8xf32, #tpu.memory_space<vmem>>, vector<1x64x8xf32>
    %139 = vector.shape_cast %138 : vector<1x64x8xf32> to vector<64x8xf32>
    %140 = vector.shape_cast %137 : vector<64x8xf32> to vector<1x64x8xf32>
    tpu.vector_store %arg8[%c0_38, %c0_39, %c0_40], %140 {strides = array<i32>} : memref<1x64x8xf32, #tpu.memory_space<vmem>>, vector<1x64x8xf32>,
    return
  }
  func.func @transform_0(%arg0: i32, %arg1: i32) -> (i32, i32, i32, i32) {
    %c0_i32 = arith.constant 0 : i32
    %c0_i32_0 = arith.constant 0 : i32
    %c0_i32_1 = arith.constant 0 : i32
    return %arg0, %arg1, %c0_i32, %c0_i32_0 : i32, i32, i32, i32
  }
  func.func @transform_1(%arg0: i32, %arg1: i32) -> (i32, i32, i32, i32) {
    %c1_i32 = arith.constant 1 : i32
    %0 = arith.addi %arg1, %c1_i32 : i32
    %c8_i32 = arith.constant 8 : i32
    %1 = arith.muli %c8_i32, %0 : i32
    %c0_i32 = arith.constant 0 : i32
    %c0_i32_0 = arith.constant 0 : i32
    %c0_i32_1 = arith.constant 0 : i32
    return %arg0, %1, %c0_i32, %c0_i32_0 : i32, i32, i32, i32
  }
  func.func @transform_2(%arg0: i32, %arg1: i32) -> (i32, i32, i32, i32) {
    %c0_i32 = arith.constant 0 : i32
    %c0_i32_0 = arith.constant 0 : i32
    %c0_i32_1 = arith.constant 0 : i32
    %c0_i32_2 = arith.constant 0 : i32
    return %arg1, %c0_i32, %c0_i32_0, %c0_i32_1 : i32, i32, i32, i32
  }
  func.func @transform_3(%arg0: i32, %arg1: i32) -> (i32, i32, i32, i32) {
    %c0_i32 = arith.constant 0 : i32
    %c0_i32_0 = arith.constant 0 : i32
    %c0_i32_1 = arith.constant 0 : i32
    %c0_i32_2 = arith.constant 0 : i32
    return %arg1, %c0_i32, %c0_i32_0, %c0_i32_1 : i32, i32, i32, i32
  }
  func.func @transform_4(%arg0: i32, %arg1: i32) -> (i32, i32) {
    %c0_i32 = arith.constant 0 : i32
    %c0_i32_0 = arith.constant 0 : i32
    %c0_i32_1 = arith.constant 0 : i32
    return %c0_i32, %c0_i32_0 : i32, i32
  }
  func.func @transform_5(%arg0: i32, %arg1: i32) -> (i32, i32) {
    %c0_i32 = arith.constant 0 : i32
    %c0_i32_0 = arith.constant 0 : i32
    %c0_i32_1 = arith.constant 0 : i32
    return %c0_i32, %c0_i32_0 : i32, i32
  }
  func.func @transform_6(%arg0: i32, %arg1: i32) -> (i32, i32, i32) {
    %c0_i32 = arith.constant 0 : i32
    %c0_i32_0 = arith.constant 0 : i32
    return %arg0, %arg1, %c0_i32 : i32, i32, i32
  }
}

</mosaic_0001>

<llo_original>
// kernel: adown_forward.1
$region0: #{adown_forward.1}
  #allocation0 [shape = 'u32[]', space=smem, size = 0x4, offset = 0x4, fixed_abs, tag = 'smem constant byte address 0x4 - core index']
  #allocation1 [shape = 'u32[144,128]{1,0:T(1,128)}', space=vmem, size = 0x12000, scoped, tag = 'internal scratch']
  %s0 = inlined_call_operand.vmem [shape: f32[4,18,8,4], index: 0, kind: input, shape index: {}, may-alias: {0,1}]
  %s1 = inlined_call_operand.vmem [shape: f32[4,18,8,4], index: 1, kind: input, shape index: {}, may-alias: {0,1}]
  %s2 = inlined_call_operand.vmem [shape: s32[1,9,1,1], index: 2, kind: input, shape index: {}]
  %s3 = inlined_call_operand.vmem [shape: s32[1,8,1,1], index: 3, kind: input, shape index: {}]
  %s4 = inlined_call_operand.vmem [shape: f32[20,8], index: 4, kind: input, shape index: {}]
  %s5 = inlined_call_operand.vmem [shape: f32[1,8], index: 5, kind: input, shape index: {}]
  %s6 = inlined_call_operand.vmem [shape: f32[2,64,8], index: 6, kind: output, shape index: {}]
  %s7 = sld [smem:[#allocation0]]
  $region147: #{adown_forward.1} parent=0
    _
  %s9 = ssub.s32 1, %s7
  %s10 = scalar_select 0, %s9, %s7
  $region1: #{adown_forward.1} parent=0
    #allocation2 [shape = 'u8[262144]{0}', space=vmem, size = 0x40000, scoped, tag = 'input window, operand 0']
    #allocation3 [shape = 'u8[32768]{0}', space=vmem, size = 0x8000, scoped, tag = 'input window, operand 1']
    loop: start=0, step=1, limit=4
    $region2: #{adown_forward.1} parent=1 // loop_pre_header
      _
    $region3: #{adown_forward.1} parent=1 // loop_header
      %s12 = sphi 0, %s16
      %p13 = scmp.ge.s32.totalorder %s12, 4
      %s19 = sphi 0, %s31
      %s20 = sphi 0, %s27
      %s21 = sphi 0, %s19
      %s22 = sphi 0, %s20
      %s23 = sphi 0, %s21
      %s24 = sphi 0, %s22
      %s36 = sphi 0, %s38
      %s39 = sphi 0, %s36
      %s40 = sphi 0, %s39
      %s56 = sphi 0, %s40
      %s68 = sphi 0, %s70
      %s71 = sphi 0, %s68
      %s72 = sphi 0, %s71
      %s88 = sphi 0, %s72
      %s94 = sphi 0, %s96
      %s97 = sphi 0, %s94
      %s98 = sphi 0, %s97
      %s114 = sphi 0, %s98
      %s120 = sphi 0, %s122
      %s123 = sphi 0, %s120
      %s124 = sphi 0, %s123
      %s140 = sphi 0, %s124
      %s144 = sphi 0, %s144
      %s146 = sphi 0, %s144
      %s147 = sphi 0, %s146
      %s161 = sphi 0, %s147
      %s165 = sphi 0, %s165
      %s167 = sphi 0, %s165
      %s168 = sphi 0, %s167
      %s182 = sphi 0, %s168
      %s190 = sphi 0, %s192
      %s193 = sphi 0, %s190
      %s194 = sphi 0, %s193
      %s210 = sphi 0, %s194
    $region4: #{adown_forward.1} parent=1 // loop_header_branch
      %15 = sbr.rel (%p13) target = $region8
    $region5: #{adown_forward.1} parent=1 // loop_body
      %s17 = ssub.s32 %s12, 1
      %s18 = ssub.s32 %s12, 2
      %s25 = sadd.s32 1, %s20
      %p26 = scmp.ge.s32.totalorder %s25, 1
      %s27 = scalar_select %p26, 0, %s25
      %s28 = sadd.s32 1, %s19
      %s29 = scalar_select %p26, %s28, %s19
      %p30 = scmp.ge.s32.totalorder %s29, 2
      %s31 = scalar_select %p30, 0, %s29
      %s32 = ssub.s32 %s19, %s31
      %s33 = ssub.s32 %s20, %s27
      %s34 = sor.u32 %s32, %s33
      %p35 = scmp.eq.s32.totalorder %s34, 0
      %s37 = sadd.s32 %s36, 1
      %s38 = scalar_select %p35, %s36, %s37
      %p41 = pneg %p35
      %p42 = scmp.eq.s32.totalorder %s12, 1
      %p43 = por %p41, %p42
      %p44 = scmp.ne.s32.totalorder %s36, %s39
      %p45 = scmp.eq.s32.totalorder %s12, 0
      %p46 = por %p44, %p45
      %p47 = scmp.ne.s32.totalorder %s36, %s39
      %p48 = scmp.eq.s32.totalorder %s17, 1
      %p49 = por %p47, %p48
      %p50 = scmp.ne.s32.totalorder %s39, %s40
      %p51 = scmp.eq.s32.totalorder %s17, 0
      %p52 = por %p50, %p51
      %p53 = scmp.ne.s32.totalorder %s39, %s40
      %p54 = scmp.eq.s32.totalorder %s18, 1
      %p55 = por %p53, %p54
      %p57 = scmp.ne.s32.totalorder %s40, %s56
      %p58 = scmp.eq.s32.totalorder %s18, 0
      %p59 = por %p57, %p58
      %s60 = sadd.s32 %s20, 1
      %s61 = smul.u32 %s60, 8
      %s62 = sadd.s32 %s27, 1
      %s63 = smul.u32 %s62, 8
      %s64 = ssub.s32 %s19, %s31
      %s65 = ssub.s32 %s61, %s63
      %s66 = sor.u32 %s64, %s65
      %p67 = scmp.eq.s32.totalorder %s66, 0
      %s69 = sadd.s32 %s68, 1
      %s70 = scalar_select %p67, %s68, %s69
      %p73 = pneg %p67
      %p74 = scmp.eq.s32.totalorder %s12, 1
      %p75 = por %p73, %p74
      %p76 = scmp.ne.s32.totalorder %s68, %s71
      %p77 = scmp.eq.s32.totalorder %s12, 0
      %p78 = por %p76, %p77
      %p79 = scmp.ne.s32.totalorder %s68, %s71
      %p80 = scmp.eq.s32.totalorder %s17, 1
      %p81 = por %p79, %p80
      %p82 = scmp.ne.s32.totalorder %s71, %s72
      %p83 = scmp.eq.s32.totalorder %s17, 0
      %p84 = por %p82, %p83
      %p85 = scmp.ne.s32.totalorder %s71, %s72
      %p86 = scmp.eq.s32.totalorder %s18, 1
      %p87 = por %p85, %p86
      %p89 = scmp.ne.s32.totalorder %s72, %s88
      %p90 = scmp.eq.s32.totalorder %s18, 0
      %p91 = por %p89, %p90
      %s92 = ssub.s32 %s20, %s27
      %p93 = scmp.eq.s32.totalorder %s92, 0
      %s95 = sadd.s32 %s94, 1
      %s96 = scalar_select %p93, %s94, %s95
      %p99 = pneg %p93
      %p100 = scmp.eq.s32.totalorder %s12, 1
      %p101 = por %p99, %p100
      %p102 = scmp.ne.s32.totalorder %s94, %s97
      %p103 = scmp.eq.s32.totalorder %s12, 0
      %p104 = por %p102, %p103
      %p105 = scmp.ne.s32.totalorder %s94, %s97
      %p106 = scmp.eq.s32.totalorder %s17, 1
      %p107 = por %p105, %p106
      %p108 = scmp.ne.s32.totalorder %s97, %s98
      %p109 = scmp.eq.s32.totalorder %s17, 0
      %p110 = por %p108, %p109
      %p111 = scmp.ne.s32.totalorder %s97, %s98
      %p112 = scmp.eq.s32.totalorder %s18, 1
      %p113 = por %p111, %p112
      %p115 = scmp.ne.s32.totalorder %s98, %s114
      %p116 = scmp.eq.s32.totalorder %s18, 0
      %p117 = por %p115, %p116
      %s118 = ssub.s32 %s20, %s27
      %p119 = scmp.eq.s32.totalorder %s118, 0
      %s121 = sadd.s32 %s120, 1
      %s122 = scalar_select %p119, %s120, %s121
      %p125 = pneg %p119
      %p126 = scmp.eq.s32.totalorder %s12, 1
      %p127 = por %p125, %p126
      %p128 = scmp.ne.s32.totalorder %s120, %s123
      %p129 = scmp.eq.s32.totalorder %s12, 0
      %p130 = por %p128, %p129
      %p131 = scmp.ne.s32.totalorder %s120, %s123
      %p132 = scmp.eq.s32.totalorder %s17, 1
      %p133 = por %p131, %p132
      %p134 = scmp.ne.s32.totalorder %s123, %s124
      %p135 = scmp.eq.s32.totalorder %s17, 0
      %p136 = por %p134, %p135
      %p137 = scmp.ne.s32.totalorder %s123, %s124
      %p138 = scmp.eq.s32.totalorder %s18, 1
      %p139 = por %p137, %p138
      %p141 = scmp.ne.s32.totalorder %s124, %s140
      %p142 = scmp.eq.s32.totalorder %s18, 0
      %p143 = por %p141, %p142
      %s145 = sadd.s32 %s144, 1
      %p148 = scmp.eq.s32.totalorder %s12, 1
      %p149 = scmp.ne.s32.totalorder %s144, %s146
      %p150 = scmp.eq.s32.totalorder %s12, 0
      %p151 = por %p149, %p150
      %p152 = scmp.ne.s32.totalorder %s144, %s146
      %p153 = scmp.eq.s32.totalorder %s17, 1
      %p154 = por %p152, %p153
      %p155 = scmp.ne.s32.totalorder %s146, %s147
      %p156 = scmp.eq.s32.totalorder %s17, 0
      %p157 = por %p155, %p156
      %p158 = scmp.ne.s32.totalorder %s146, %s147
      %p159 = scmp.eq.s32.totalorder %s18, 1
      %p160 = por %p158, %p159
      %p162 = scmp.ne.s32.totalorder %s147, %s161
      %p163 = scmp.eq.s32.totalorder %s18, 0
      %p164 = por %p162, %p163
      %s166 = sadd.s32 %s165, 1
      %p169 = scmp.eq.s32.totalorder %s12, 1
      %p170 = scmp.ne.s32.totalorder %s165, %s167
      %p171 = scmp.eq.s32.totalorder %s12, 0
      %p172 = por %p170, %p171
      %p173 = scmp.ne.s32.totalorder %s165, %s167
      %p174 = scmp.eq.s32.totalorder %s17, 1
      %p175 = por %p173, %p174
      %p176 = scmp.ne.s32.totalorder %s167, %s168
      %p177 = scmp.eq.s32.totalorder %s17, 0
      %p178 = por %p176, %p177
      %p179 = scmp.ne.s32.totalorder %s167, %s168
      %p180 = scmp.eq.s32.totalorder %s18, 1
      %p181 = por %p179, %p180
      %p183 = scmp.ne.s32.totalorder %s168, %s182
      %p184 = scmp.eq.s32.totalorder %s18, 0
      %p185 = por %p183, %p184
      %s186 = ssub.s32 %s19, %s31
      %s187 = ssub.s32 %s20, %s27
      %s188 = sor.u32 %s186, %s187
      %p189 = scmp.eq.s32.totalorder %s188, 0
      %s191 = sadd.s32 %s190, 1
      %s192 = scalar_select %p189, %s190, %s191
      %p195 = pneg %p189
      %p196 = scmp.eq.s32.totalorder %s12, 1
      %p197 = por %p195, %p196
      %p198 = scmp.ne.s32.totalorder %s190, %s193
      %p199 = scmp.eq.s32.totalorder %s12, 0
      %p200 = por %p198, %p199
      %p201 = scmp.ne.s32.totalorder %s190, %s193
      %p202 = scmp.eq.s32.totalorder %s17, 1
      %p203 = por %p201, %p202
      %p204 = scmp.ne.s32.totalorder %s193, %s194
      %p205 = scmp.eq.s32.totalorder %s17, 0
      %p206 = por %p204, %p205
      %p207 = scmp.ne.s32.totalorder %s193, %s194
      %p208 = scmp.eq.s32.totalorder %s18, 1
      %p209 = por %p207, %p208
      %p211 = scmp.ne.s32.totalorder %s194, %s210
      %p212 = scmp.eq.s32.totalorder %s18, 0
      %p213 = por %p211, %p212
      %p214 = scmp.le.s32.totalorder 1, %s12
      %p215 = scmp.lt.s32.totalorder %s12, 3
      %p216 = pnand %p214, %p215
      %p217 = pneg %p216
      // Predicated region
      $region9: #{adown_forward.1} parent=5 // pred_check
        _
      $region10: #{adown_forward.1} parent=5 // pred_check_branch
        %219 = sbr.rel (%p216) target = $region12
      $region11: #{adown_forward.1} parent=5 // pred_region
        %s220 = ssub.s32 %s12, 1
        // Predicated region
        $region13: #{adown_forward.1} parent=11 // pred_check
          %p221 = pneg %p110
        $region14: #{adown_forward.1} parent=11 // pred_check_branch
          %223 = sbr.rel (%p221) target = $region16
        $region15: #{adown_forward.1} parent=11 // pred_region
          %p224 = scmp.lt.s32.totalorder %s22, 0
          %s225 = scalar_select %p224, %s22, 0
          %s226 = smul.addr %s225, 9
          %s227 = scalar_lea.vmem %s2, %s226
        $region16: #{adown_forward.1} parent=11 // pred_fallthru
          _
        // Predicated region
        $region17: #{adown_forward.1} parent=11 // pred_check
          %p228 = pneg %p136
        $region18: #{adown_forward.1} parent=11 // pred_check_branch
          %230 = sbr.rel (%p228) target = $region20
        $region19: #{adown_forward.1} parent=11 // pred_region
          %p231 = scmp.lt.s32.totalorder %s22, 0
          %s232 = scalar_select %p231, %s22, 0
          %s233 = smul.addr %s232, 8
          %s234 = scalar_lea.vmem %s3, %s233
        $region20: #{adown_forward.1} parent=11 // pred_fallthru
          _
        // Predicated region
        $region21: #{adown_forward.1} parent=11 // pred_check
          %p235 = pneg %p157
        $region22: #{adown_forward.1} parent=11 // pred_check_branch
          %237 = sbr.rel (%p235) target = $region24
        $region23: #{adown_forward.1} parent=11 // pred_region
          _
        $region24: #{adown_forward.1} parent=11 // pred_fallthru
          _
        // Predicated region
        $region25: #{adown_forward.1} parent=11 // pred_check
          %p238 = pneg %p178
        $region26: #{adown_forward.1} parent=11 // pred_check_branch
          %240 = sbr.rel (%p238) target = $region28
        $region27: #{adown_forward.1} parent=11 // pred_region
          _
        $region28: #{adown_forward.1} parent=11 // pred_fallthru
          _
      $region12: #{adown_forward.1} parent=5 // pred_fallthru
        _
      %p241 = scmp.lt.s32.totalorder %s12, 2
      // Predicated region
      $region29: #{adown_forward.1} parent=5 // pred_check
        %p242 = pneg %p241
      $region30: #{adown_forward.1} parent=5 // pred_check_branch
        %244 = sbr.rel (%p242) target = $region32
      $region31: #{adown_forward.1} parent=5 // pred_region
        // Predicated region
        $region33: #{adown_forward.1} parent=31 // pred_check
          %p245 = pneg %p46
        $region34: #{adown_forward.1} parent=31 // pred_check_branch
          %247 = sbr.rel (%p245) target = $region36
        $region35: #{adown_forward.1} parent=31 // pred_region
          %s248 = sand.u32 %s36, 1
          %s249 = sand.u32 %s36, 1
          %s250 = smul.addr %s249, 256
          %s251 = scalar_lea.vmem [#allocation2], %s250
          %s252 = smul.u32 2, %s19
          %s253 = smul.u32 16, %s20
          %s254 = ssub.s32 18, %s253
          %p255 = scmp.lt.s32.totalorder %s254, 16
          %s256 = scalar_select %p255, %s254, 16
          %s257 = smul.u32 256, %s256
          %p258 = scmp.ne.s32.totalorder 0, %s257
          %s259 = smul.addr %s252, 18
          %s260 = sadd.s32 %s253, %s259
          %s261 = smul.addr %s260, 8
          %s262 = scalar_lea.vmem %s0, %s261
          // Predicated region
          $region37: #{adown_forward.1} parent=35 // pred_check
            %p263 = pneg %p258
          $region38: #{adown_forward.1} parent=35 // pred_check_branch
            %265 = sbr.rel (%p263) target = $region40
          $region39: #{adown_forward.1} parent=35 // pred_region
            // Predicated region
            $region41: #{adown_forward.1} parent=39 // pred_check
              _
            $region42: #{adown_forward.1} parent=39 // pred_check_branch
              %267 = sbr.rel (0) target = $region44
            $region43: #{adown_forward.1} parent=39 // pred_region
              // Predicated region
              $region63: #{adown_forward.1} parent=43 // pred_check
                _
              $region64: #{adown_forward.1} parent=43 // pred_check_branch
                %380 = sbr.rel (0) target = $region66
              $region65: #{adown_forward.1} parent=43 // pred_region
                %s381 = sshrl.u32 %s256, 4
                // While loop
                $region67: #{adown_forward.1} parent=65 // loop_pre_header
                  _
                $region68: #{adown_forward.1} parent=65 // loop_header
                  %s383 = sphi 0, %s385
                  %p384 = scmp.ge.s32.totalorder %s383, %s381
                  %s388 = sphi 0, %s457
                  %s389 = sphi %s262, %s460
                  %s390 = sphi %s251, %s461
                $region69: #{adown_forward.1} parent=65 // loop_header_branch
                  %387 = sbr.rel (%p384) target = $region73
                $region70: #{adown_forward.1} parent=65 // loop_body
                  %v391 = vld [vmem:[%s389] sm:$0xff]
                  %392 = vst [vmem:[%s390] sm:$0xff] %v391
                  %v393 = vld [vmem:[%s389 + $0x8] sm:$0xff]
                  %394 = vst [vmem:[%s390 + $0x8] sm:$0xff] %v393
                  %v395 = vld [vmem:[%s389 + $0x10] sm:$0xff]
                  %396 = vst [vmem:[%s390 + $0x10] sm:$0xff] %v395
                  %v397 = vld [vmem:[%s389 + $0x18] sm:$0xff]
                  %398 = vst [vmem:[%s390 + $0x18] sm:$0xff] %v397
                  %v399 = vld [vmem:[%s389 + $0x20] sm:$0xff]
                  %400 = vst [vmem:[%s390 + $0x20] sm:$0xff] %v399
                  %v401 = vld [vmem:[%s389 + $0x28] sm:$0xff]
                  %402 = vst [vmem:[%s390 + $0x28] sm:$0xff] %v401
                  %v403 = vld [vmem:[%s389 + $0x30] sm:$0xff]
                  %404 = vst [vmem:[%s390 + $0x30] sm:$0xff] %v403
                  %v405 = vld [vmem:[%s389 + $0x38] sm:$0xff]
                  %406 = vst [vmem:[%s390 + $0x38] sm:$0xff] %v405
                  %v407 = vld [vmem:[%s389 + $0x40] sm:$0xff]
                  %408 = vst [vmem:[%s390 + $0x40] sm:$0xff] %v407
                  %v409 = vld [vmem:[%s389 + $0x48] sm:$0xff]
                  %410 = vst [vmem:[%s390 + $0x48] sm:$0xff] %v409
                  %v411 = vld [vmem:[%s389 + $0x50] sm:$0xff]
                  %412 = vst [vmem:[%s390 + $0x50] sm:$0xff] %v411
                  %v413 = vld [vmem:[%s389 + $0x58] sm:$0xff]
                  %414 = vst [vmem:[%s390 + $0x58] sm:$0xff] %v413
                  %v415 = vld [vmem:[%s389 + $0x60] sm:$0xff]
                  %416 = vst [vmem:[%s390 + $0x60] sm:$0xff] %v415
                  %v417 = vld [vmem:[%s389 + $0x68] sm:$0xff]
                  %418 = vst [vmem:[%s390 + $0x68] sm:$0xff] %v417
                  %v419 = vld [vmem:[%s389 + $0x70] sm:$0xff]
                  %420 = vst [vmem:[%s390 + $0x70] sm:$0xff] %v419
                  %v421 = vld [vmem:[%s389 + $0x78] sm:$0xff]
                  %422 = vst [vmem:[%s390 + $0x78] sm:$0xff] %v421
                  %v423 = vld [vmem:[%s389 + $0x90] sm:$0xff]
                  %424 = vst [vmem:[%s390 + $0x80] sm:$0xff] %v423
                  %v425 = vld [vmem:[%s389 + $0x98] sm:$0xff]
                  %426 = vst [vmem:[%s390 + $0x88] sm:$0xff] %v425
                  %v427 = vld [vmem:[%s389 + $0xa0] sm:$0xff]
                  %428 = vst [vmem:[%s390 + $0x90] sm:$0xff] %v427
                  %v429 = vld [vmem:[%s389 + $0xa8] sm:$0xff]
                  %430 = vst [vmem:[%s390 + $0x98] sm:$0xff] %v429
                  %v431 = vld [vmem:[%s389 + $0xb0] sm:$0xff]
                  %432 = vst [vmem:[%s390 + $0xa0] sm:$0xff] %v431
                  %v433 = vld [vmem:[%s389 + $0xb8] sm:$0xff]
                  %434 = vst [vmem:[%s390 + $0xa8] sm:$0xff] %v433
                  %v435 = vld [vmem:[%s389 + $0xc0] sm:$0xff]
                  %436 = vst [vmem:[%s390 + $0xb0] sm:$0xff] %v435
                  %v437 = vld [vmem:[%s389 + $0xc8] sm:$0xff]
                  %438 = vst [vmem:[%s390 + $0xb8] sm:$0xff] %v437
                  %v439 = vld [vmem:[%s389 + $0xd0] sm:$0xff]
                  %440 = vst [vmem:[%s390 + $0xc0] sm:$0xff] %v439
                  %v441 = vld [vmem:[%s389 + $0xd8] sm:$0xff]
                  %442 = vst [vmem:[%s390 + $0xc8] sm:$0xff] %v441
                  %v443 = vld [vmem:[%s389 + $0xe0] sm:$0xff]
                  %444 = vst [vmem:[%s390 + $0xd0] sm:$0xff] %v443
                  %v445 = vld [vmem:[%s389 + $0xe8] sm:$0xff]
                  %446 = vst [vmem:[%s390 + $0xd8] sm:$0xff] %v445
                  %v447 = vld [vmem:[%s389 + $0xf0] sm:$0xff]
                  %448 = vst [vmem:[%s390 + $0xe0] sm:$0xff] %v447
                  %v449 = vld [vmem:[%s389 + $0xf8] sm:$0xff]
                  %450 = vst [vmem:[%s390 + $0xe8] sm:$0xff] %v449
                  %v451 = vld [vmem:[%s389 + $0x100] sm:$0xff]
                  %452 = vst [vmem:[%s390 + $0xf0] sm:$0xff] %v451
                  %v453 = vld [vmem:[%s389 + $0x108] sm:$0xff]
                  %454 = vst [vmem:[%s390 + $0xf8] sm:$0xff] %v453
                  %s455 = sadd.s32 1, %s388
                  %p456 = scmp.ge.s32.totalorder %s455, %s381
                  %s457 = scalar_select %p456, 0, %s455
                  %s458 = smul.u32 %s457, 128
                  %s459 = smul.u32 %s457, 128
                  %s460 = scalar_lea.vmem %s262, %s458
                  %s461 = scalar_lea.vmem %s251, %s459 [#allocation2]
                $region71: #{adown_forward.1} parent=65 // loop_footer
                  %s385 = sadd.s32 %s383, 1
                $region72: #{adown_forward.1} parent=65 // loop_footer_branch
                  %382 = sbr.rel target = $region68
                $region73: #{adown_forward.1} parent=65 // loop_exit
                  _
                %s462 = sshrl.u32 %s256, 4
                %s463 = sand.u32 %s256, 15
                %s464 = smul.u32 %s462, 16
                %s465 = smul.u32 8, %s464
                %s466 = scalar_lea.vmem %s262, %s465
                %s467 = smul.u32 8, %s464
                %s468 = scalar_lea.vmem %s251, %s467 [#allocation2]
                // While loop
                $region74: #{adown_forward.1} parent=65 // loop_pre_header
                  _
                $region75: #{adown_forward.1} parent=65 // loop_header
                  %s470 = sphi 0, %s472
                  %p471 = scmp.ge.s32.totalorder %s470, %s463
                  %s475 = sphi 0, %s484
                  %s476 = sphi %s466, %s487
                  %s477 = sphi %s468, %s488
                $region76: #{adown_forward.1} parent=65 // loop_header_branch
                  %474 = sbr.rel (%p471) target = $region80
                $region77: #{adown_forward.1} parent=65 // loop_body
                  %v478 = vld [vmem:[%s476] sm:$0xff]
                  %479 = vst [vmem:[%s477] sm:$0xff] %v478
                  %v480 = vld [vmem:[%s476 + $0x90] sm:$0xff]
                  %481 = vst [vmem:[%s477 + $0x80] sm:$0xff] %v480
                  %s482 = sadd.s32 1, %s475
                  %p483 = scmp.ge.s32.totalorder %s482, %s463
                  %s484 = scalar_select %p483, 0, %s482
                  %s485 = smul.u32 %s484, 8
                  %s486 = smul.u32 %s484, 8
                  %s487 = scalar_lea.vmem %s466, %s485
                  %s488 = scalar_lea.vmem %s468, %s486 [#allocation2]
                $region78: #{adown_forward.1} parent=65 // loop_footer
                  %s472 = sadd.s32 %s470, 1
                $region79: #{adown_forward.1} parent=65 // loop_footer_branch
                  %469 = sbr.rel target = $region75
                $region80: #{adown_forward.1} parent=65 // loop_exit
                  _
              $region66: #{adown_forward.1} parent=43 // pred_fallthru
                _
              // Predicated region
              $region81: #{adown_forward.1} parent=43 // pred_check
                _
              $region82: #{adown_forward.1} parent=43 // pred_check_branch
                %490 = sbr.rel target = $region84
              $region83: #{adown_forward.1} parent=43 // pred_region
                _
              $region84: #{adown_forward.1} parent=43 // pred_fallthru
                _
            $region44: #{adown_forward.1} parent=39 // pred_fallthru
              _
            // Predicated region
            $region45: #{adown_forward.1} parent=39 // pred_check
              _
            $region46: #{adown_forward.1} parent=39 // pred_check_branch
              %269 = sbr.rel target = $region48
            $region47: #{adown_forward.1} parent=39 // pred_region
              %s271 = sshrl.u32 %s256, 4
              // While loop
              $region49: #{adown_forward.1} parent=47 // loop_pre_header
                _
              $region50: #{adown_forward.1} parent=47 // loop_header
                %s273 = sphi 0, %s275
                %p274 = scmp.ge.s32.totalorder %s273, %s271
                %s278 = sphi 0, %s347
                %s279 = sphi %s262, %s350
                %s280 = sphi %s251, %s351
              $region51: #{adown_forward.1} parent=47 // loop_header_branch
                %277 = sbr.rel (%p274) target = $region55
              $region52: #{adown_forward.1} parent=47 // loop_body
                %v281 = vld [vmem:[%s279] sm:$0xff]
                %282 = vst [vmem:[%s280] sm:$0xff] %v281
                %v283 = vld [vmem:[%s279 + $0x8] sm:$0xff]
                %284 = vst [vmem:[%s280 + $0x8] sm:$0xff] %v283
                %v285 = vld [vmem:[%s279 + $0x10] sm:$0xff]
                %286 = vst [vmem:[%s280 + $0x10] sm:$0xff] %v285
                %v287 = vld [vmem:[%s279 + $0x18] sm:$0xff]
                %288 = vst [vmem:[%s280 + $0x18] sm:$0xff] %v287
                %v289 = vld [vmem:[%s279 + $0x20] sm:$0xff]
                %290 = vst [vmem:[%s280 + $0x20] sm:$0xff] %v289
                %v291 = vld [vmem:[%s279 + $0x28] sm:$0xff]
                %292 = vst [vmem:[%s280 + $0x28] sm:$0xff] %v291
                %v293 = vld [vmem:[%s279 + $0x30] sm:$0xff]
                %294 = vst [vmem:[%s280 + $0x30] sm:$0xff] %v293
                %v295 = vld [vmem:[%s279 + $0x38] sm:$0xff]
                %296 = vst [vmem:[%s280 + $0x38] sm:$0xff] %v295
                %v297 = vld [vmem:[%s279 + $0x40] sm:$0xff]
                %298 = vst [vmem:[%s280 + $0x40] sm:$0xff] %v297
                %v299 = vld [vmem:[%s279 + $0x48] sm:$0xff]
                %300 = vst [vmem:[%s280 + $0x48] sm:$0xff] %v299
                %v301 = vld [vmem:[%s279 + $0x50] sm:$0xff]
                %302 = vst [vmem:[%s280 + $0x50] sm:$0xff] %v301
                %v303 = vld [vmem:[%s279 + $0x58] sm:$0xff]
                %304 = vst [vmem:[%s280 + $0x58] sm:$0xff] %v303
                %v305 = vld [vmem:[%s279 + $0x60] sm:$0xff]
                %306 = vst [vmem:[%s280 + $0x60] sm:$0xff] %v305
                %v307 = vld [vmem:[%s279 + $0x68] sm:$0xff]
                %308 = vst [vmem:[%s280 + $0x68] sm:$0xff] %v307
                %v309 = vld [vmem:[%s279 + $0x70] sm:$0xff]
                %310 = vst [vmem:[%s280 + $0x70] sm:$0xff] %v309
                %v311 = vld [vmem:[%s279 + $0x78] sm:$0xff]
                %312 = vst [vmem:[%s280 + $0x78] sm:$0xff] %v311
                %v313 = vld [vmem:[%s279 + $0x90] sm:$0xff]
                %314 = vst [vmem:[%s280 + $0x80] sm:$0xff] %v313
                %v315 = vld [vmem:[%s279 + $0x98] sm:$0xff]
                %316 = vst [vmem:[%s280 + $0x88] sm:$0xff] %v315
                %v317 = vld [vmem:[%s279 + $0xa0] sm:$0xff]
                %318 = vst [vmem:[%s280 + $0x90] sm:$0xff] %v317
                %v319 = vld [vmem:[%s279 + $0xa8] sm:$0xff]
                %320 = vst [vmem:[%s280 + $0x98] sm:$0xff] %v319
                %v321 = vld [vmem:[%s279 + $0xb0] sm:$0xff]
                %322 = vst [vmem:[%s280 + $0xa0] sm:$0xff] %v321
                %v323 = vld [vmem:[%s279 + $0xb8] sm:$0xff]
                %324 = vst [vmem:[%s280 + $0xa8] sm:$0xff] %v323
                %v325 = vld [vmem:[%s279 + $0xc0] sm:$0xff]
                %326 = vst [vmem:[%s280 + $0xb0] sm:$0xff] %v325
                %v327 = vld [vmem:[%s279 + $0xc8] sm:$0xff]
                %328 = vst [vmem:[%s280 + $0xb8] sm:$0xff] %v327
                %v329 = vld [vmem:[%s279 + $0xd0] sm:$0xff]
                %330 = vst [vmem:[%s280 + $0xc0] sm:$0xff] %v329
                %v331 = vld [vmem:[%s279 + $0xd8] sm:$0xff]
                %332 = vst [vmem:[%s280 + $0xc8] sm:$0xff] %v331
                %v333 = vld [vmem:[%s279 + $0xe0] sm:$0xff]
                %334 = vst [vmem:[%s280 + $0xd0] sm:$0xff] %v333
                %v335 = vld [vmem:[%s279 + $0xe8] sm:$0xff]
                %336 = vst [vmem:[%s280 + $0xd8] sm:$0xff] %v335
                %v337 = vld [vmem:[%s279 + $0xf0] sm:$0xff]
                %338 = vst [vmem:[%s280 + $0xe0] sm:$0xff] %v337
                %v339 = vld [vmem:[%s279 + $0xf8] sm:$0xff]
                %340 = vst [vmem:[%s280 + $0xe8] sm:$0xff] %v339
                %v341 = vld [vmem:[%s279 + $0x100] sm:$0xff]
                %342 = vst [vmem:[%s280 + $0xf0] sm:$0xff] %v341
                %v343 = vld [vmem:[%s279 + $0x108] sm:$0xff]
                %344 = vst [vmem:[%s280 + $0xf8] sm:$0xff] %v343
                %s345 = sadd.s32 1, %s278
                %p346 = scmp.ge.s32.totalorder %s345, %s271
                %s347 = scalar_select %p346, 0, %s345
                %s348 = smul.u32 %s347, 128
                %s349 = smul.u32 %s347, 128
                %s350 = scalar_lea.vmem %s262, %s348
                %s351 = scalar_lea.vmem %s251, %s349 [#allocation2]
              $region53: #{adown_forward.1} parent=47 // loop_footer
                %s275 = sadd.s32 %s273, 1
              $region54: #{adown_forward.1} parent=47 // loop_footer_branch
                %272 = sbr.rel target = $region50
              $region55: #{adown_forward.1} parent=47 // loop_exit
                _
              %s352 = sshrl.u32 %s256, 4
              %s353 = sand.u32 %s256, 15
              %s354 = smul.u32 %s352, 16
              %s355 = smul.u32 8, %s354
              %s356 = scalar_lea.vmem %s262, %s355
              %s357 = smul.u32 8, %s354
              %s358 = scalar_lea.vmem %s251, %s357 [#allocation2]
              // While loop
              $region56: #{adown_forward.1} parent=47 // loop_pre_header
                _
              $region57: #{adown_forward.1} parent=47 // loop_header
                %s360 = sphi 0, %s362
                %p361 = scmp.ge.s32.totalorder %s360, %s353
                %s365 = sphi 0, %s374
                %s366 = sphi %s356, %s377
                %s367 = sphi %s358, %s378
              $region58: #{adown_forward.1} parent=47 // loop_header_branch
                %364 = sbr.rel (%p361) target = $region62
              $region59: #{adown_forward.1} parent=47 // loop_body
                %v368 = vld [vmem:[%s366] sm:$0xff]
                %369 = vst [vmem:[%s367] sm:$0xff] %v368
                %v370 = vld [vmem:[%s366 + $0x90] sm:$0xff]
                %371 = vst [vmem:[%s367 + $0x80] sm:$0xff] %v370
                %s372 = sadd.s32 1, %s365
                %p373 = scmp.ge.s32.totalorder %s372, %s353
                %s374 = scalar_select %p373, 0, %s372
                %s375 = smul.u32 %s374, 8
                %s376 = smul.u32 %s374, 8
                %s377 = scalar_lea.vmem %s356, %s375
                %s378 = scalar_lea.vmem %s358, %s376 [#allocation2]
              $region60: #{adown_forward.1} parent=47 // loop_footer
                %s362 = sadd.s32 %s360, 1
              $region61: #{adown_forward.1} parent=47 // loop_footer_branch
                %359 = sbr.rel target = $region57
              $region62: #{adown_forward.1} parent=47 // loop_exit
                _
            $region48: #{adown_forward.1} parent=39 // pred_fallthru
              _
          $region40: #{adown_forward.1} parent=35 // pred_fallthru
            _
          %491 = vnop
        $region36: #{adown_forward.1} parent=31 // pred_fallthru
          _
        // Predicated region
        $region85: #{adown_forward.1} parent=31 // pred_check
          %p492 = pneg %p78
        $region86: #{adown_forward.1} parent=31 // pred_check_branch
          %494 = sbr.rel (%p492) target = $region88
        $region87: #{adown_forward.1} parent=31 // pred_region
          %s495 = sand.u32 %s68, 1
          %s496 = sand.u32 %s68, 1
          %s497 = smul.addr %s496, 32
          %s498 = scalar_lea.vmem [#allocation3], %s497
          %s499 = sadd.s32 %s20, 1
          %s500 = smul.u32 %s499, 8
          %s501 = smul.u32 2, %s19
          %s502 = smul.u32 2, %s500
          %s503 = smul.addr %s501, 18
          %s504 = sadd.s32 %s502, %s503
          %s505 = smul.addr %s504, 8
          %s506 = scalar_lea.vmem %s1, %s505
          // Predicated region
          $region89: #{adown_forward.1} parent=87 // pred_check
            _
          $region90: #{adown_forward.1} parent=87 // pred_check_branch
            %508 = sbr.rel (0) target = $region92
          $region91: #{adown_forward.1} parent=87 // pred_region
            // Predicated region
            $region93: #{adown_forward.1} parent=91 // pred_check
              _
            $region94: #{adown_forward.1} parent=91 // pred_check_branch
              %510 = sbr.rel (0) target = $region96
            $region95: #{adown_forward.1} parent=91 // pred_region
              // Predicated region
              $region108: #{adown_forward.1} parent=95 // pred_check
                _
              $region109: #{adown_forward.1} parent=95 // pred_check_branch
                %531 = sbr.rel (0) target = $region111
              $region110: #{adown_forward.1} parent=95 // pred_region
                loop: start=0, step=1, limit=1
                $region112: #{adown_forward.1} parent=110 // loop_pre_header
                  _
                $region113: #{adown_forward.1} parent=110 // loop_header
                  %s533 = sphi 0, %s537
                  %p534 = scmp.ge.s32.totalorder %s533, 1
                  %s538 = sphi %s506, %s506
                  %s539 = sphi %s498, %s498
                $region114: #{adown_forward.1} parent=110 // loop_header_branch
                  %536 = sbr.rel (%p534) target = $region118
                $region115: #{adown_forward.1} parent=110 // loop_body
                  %v540 = vld [vmem:[%s538] sm:$0xff]
                  %541 = vst [vmem:[%s539] sm:$0xff] %v540
                  %v542 = vld [vmem:[%s538 + $0x8] sm:$0xff]
                  %543 = vst [vmem:[%s539 + $0x8] sm:$0xff] %v542
                  %v544 = vld [vmem:[%s538 + $0x90] sm:$0xff]
                  %545 = vst [vmem:[%s539 + $0x10] sm:$0xff] %v544
                  %v546 = vld [vmem:[%s538 + $0x98] sm:$0xff]
                  %547 = vst [vmem:[%s539 + $0x18] sm:$0xff] %v546
                $region116: #{adown_forward.1} parent=110 // loop_footer
                  %s537 = sadd.s32 1, %s533
                $region117: #{adown_forward.1} parent=110 // loop_footer_branch
                  %532 = sbr.rel target = $region113
                $region118: #{adown_forward.1} parent=110 // loop_exit
                  _
              $region111: #{adown_forward.1} parent=95 // pred_fallthru
                _
              // Predicated region
              $region119: #{adown_forward.1} parent=95 // pred_check
                _
              $region120: #{adown_forward.1} parent=95 // pred_check_branch
                %549 = sbr.rel target = $region122
              $region121: #{adown_forward.1} parent=95 // pred_region
                _
              $region122: #{adown_forward.1} parent=95 // pred_fallthru
                _
            $region96: #{adown_forward.1} parent=91 // pred_fallthru
              _
            // Predicated region
            $region97: #{adown_forward.1} parent=91 // pred_check
              _
            $region98: #{adown_forward.1} parent=91 // pred_check_branch
              %512 = sbr.rel target = $region100
            $region99: #{adown_forward.1} parent=91 // pred_region
              loop: start=0, step=1, limit=1
              $region101: #{adown_forward.1} parent=99 // loop_pre_header
                _
              $region102: #{adown_forward.1} parent=99 // loop_header
                %s515 = sphi 0, %s519
                %p516 = scmp.ge.s32.totalorder %s515, 1
                %s520 = sphi %s506, %s506
                %s521 = sphi %s498, %s498
              $region103: #{adown_forward.1} parent=99 // loop_header_branch
                %518 = sbr.rel (%p516) target = $region107
              $region104: #{adown_forward.1} parent=99 // loop_body
                %v522 = vld [vmem:[%s520] sm:$0xff]
                %523 = vst [vmem:[%s521] sm:$0xff] %v522
                %v524 = vld [vmem:[%s520 + $0x8] sm:$0xff]
                %525 = vst [vmem:[%s521 + $0x8] sm:$0xff] %v524
                %v526 = vld [vmem:[%s520 + $0x90] sm:$0xff]
                %527 = vst [vmem:[%s521 + $0x10] sm:$0xff] %v526
                %v528 = vld [vmem:[%s520 + $0x98] sm:$0xff]
                %529 = vst [vmem:[%s521 + $0x18] sm:$0xff] %v528
              $region105: #{adown_forward.1} parent=99 // loop_footer
                %s519 = sadd.s32 1, %s515
              $region106: #{adown_forward.1} parent=99 // loop_footer_branch
                %514 = sbr.rel target = $region102
              $region107: #{adown_forward.1} parent=99 // loop_exit
                _
            $region100: #{adown_forward.1} parent=91 // pred_fallthru
              _
          $region92: #{adown_forward.1} parent=87 // pred_fallthru
            _
          %550 = vnop
        $region88: #{adown_forward.1} parent=31 // pred_fallthru
          _
      $region32: #{adown_forward.1} parent=5 // pred_fallthru
        _
      %p551 = scmp.le.s32.totalorder 1, %s12
      %p552 = scmp.lt.s32.totalorder %s12, 3
      %p553 = pnand %p551, %p552
      %p554 = pneg %p553
      // Predicated region
      $region123: #{adown_forward.1} parent=5 // pred_check
        _
      $region124: #{adown_forward.1} parent=5 // pred_check_branch
        %556 = sbr.rel (%p553) target = $region126
      $region125: #{adown_forward.1} parent=5 // pred_region
        %s557 = ssub.s32 %s12, 1
        %s558 = sand.u32 %s39, 1
        %s559 = sand.u32 %s39, 1
        %s560 = smul.addr %s559, 256
        %s561 = scalar_lea.vmem [#allocation2], %s560
        // Predicated region
        $region127: #{adown_forward.1} parent=125 // pred_check
          %p562 = pneg %p52
        $region128: #{adown_forward.1} parent=125 // pred_check_branch
          %564 = sbr.rel (%p562) target = $region130
        $region129: #{adown_forward.1} parent=125 // pred_region
          _
        $region130: #{adown_forward.1} parent=125 // pred_fallthru
          _
        %s565 = sand.u32 %s71, 1
        %s566 = sand.u32 %s71, 1
        %s567 = smul.addr %s566, 32
        %s568 = scalar_lea.vmem [#allocation3], %s567
        // Predicated region
        $region131: #{adown_forward.1} parent=125 // pred_check
          %p569 = pneg %p84
        $region132: #{adown_forward.1} parent=125 // pred_check_branch
          %571 = sbr.rel (%p569) target = $region134
        $region133: #{adown_forward.1} parent=125 // pred_region
          _
        $region134: #{adown_forward.1} parent=125 // pred_fallthru
          _
        %s572 = sand.u32 %s39, 1
        %s573 = sand.u32 %s39, 1
        %s574 = smul.addr %s573, 256
        %s575 = scalar_lea.vmem [#allocation2], %s574
        %p576 = pneg %p52
        %p577 = pneg %p49
        %s578 = sand.u32 %s71, 1
        %s579 = sand.u32 %s71, 1
        %s580 = smul.addr %s579, 32
        %s581 = scalar_lea.vmem [#allocation3], %s580
        %p582 = pneg %p84
        %p583 = pneg %p81
        %p584 = scmp.lt.s32.totalorder %s22, 0
        %s585 = scalar_select %p584, %s22, 0
        %s586 = smul.addr %s585, 9
        %s587 = scalar_lea.vmem %s2, %s586
        %p588 = pneg %p110
        %p589 = pneg %p107
        %p590 = scmp.lt.s32.totalorder %s22, 0
        %s591 = scalar_select %p590, %s22, 0
        %s592 = smul.addr %s591, 8
        %s593 = scalar_lea.vmem %s3, %s592
        %p594 = pneg %p136
        %p595 = pneg %p133
        %p596 = pneg %p157
        %p597 = pneg %p154
        %p598 = pneg %p178
        %p599 = pneg %p175
        %p600 = pneg %p206
        %p601 = pneg %p203
        %s602 = smul.u32 8, %s22
        %p603 = scmp.lt.s32.totalorder %s21, 1
        %s604 = scalar_select %p603, %s21, 1
        %p605 = scmp.lt.s32.totalorder %s602, 7
        %s606 = scalar_select %p605, %s602, 7
        %s607 = smul.addr %s604, 8
        %s608 = sadd.s32 %s606, %s607
        %s609 = smul.addr %s608, 8
        %s610 = scalar_lea.vmem %s6, %s609
        %s611 = smul.u32 2, %s21
        %s612 = smul.u32 16, %s22
        %s613 = ssub.s32 18, %s612
        %p614 = scmp.lt.s32.totalorder %s613, 16
        %s615 = scalar_select %p614, %s613, 16
        %s616 = smul.u32 256, %s615
        %s617 = sadd.s32 %s22, 1
        %s618 = smul.u32 %s617, 8
        %s619 = smul.u32 2, %s21
        %s620 = smul.u32 2, %s618
        %p621 = scmp.lt.s32.totalorder %s22, 0
        %s622 = scalar_select %p621, %s22, 0
        %s623 = smul.addr %s622, 9
        %s624 = scalar_lea.vmem %s2, %s623
        %p625 = scmp.lt.s32.totalorder %s22, 0
        %s626 = scalar_select %p625, %s22, 0
        %s627 = smul.addr %s626, 8
        %s628 = scalar_lea.vmem %s3, %s627
        %s629 = smul.u32 8, %s22
        %p630 = scmp.lt.s32.totalorder %s21, 1
        %s631 = scalar_select %p630, %s21, 1
        %p632 = scmp.lt.s32.totalorder %s629, 7
        %s633 = scalar_select %p632, %s629, 7
        %s634 = smul.addr %s631, 8
        %s635 = sadd.s32 %s633, %s634
        %s636 = smul.addr %s635, 8
        %s637 = scalar_lea.vmem %s6, %s636
        %s638 = smul.u32 8, %s22
        %v639 = vld [vmem:[%s561] sm:$0xff]
        %v640 = vld [vmem:[%s561 + $0x8] sm:$0xff]
        %v641 = vld [vmem:[%s561 + $0x10] sm:$0xff]
        %v642 = vld [vmem:[%s561 + $0x18] sm:$0xff]
        %v643 = vld [vmem:[%s561 + $0x20] sm:$0xff]
        %v644 = vld [vmem:[%s561 + $0x28] sm:$0xff]
        %v645 = vld [vmem:[%s561 + $0x30] sm:$0xff]
        %v646 = vld [vmem:[%s561 + $0x38] sm:$0xff]
        %v647 = vld [vmem:[%s561 + $0x40] sm:$0xff]
        %v648 = vld [vmem:[%s561 + $0x48] sm:$0xff]
        %v649 = vld [vmem:[%s561 + $0x50] sm:$0xff]
        %v650 = vld [vmem:[%s561 + $0x58] sm:$0xff]
        %v651 = vld [vmem:[%s561 + $0x60] sm:$0xff]
        %v652 = vld [vmem:[%s561 + $0x68] sm:$0xff]
        %v653 = vld [vmem:[%s561 + $0x70] sm:$0xff]
        %v654 = vld [vmem:[%s561 + $0x78] sm:$0xff]
        %v655 = vld [vmem:[%s561 + $0x80] sm:$0xff]
        %v656 = vld [vmem:[%s561 + $0x88] sm:$0xff]
        %v657 = vld [vmem:[%s561 + $0x90] sm:$0xff]
        %v658 = vld [vmem:[%s561 + $0x98] sm:$0xff]
        %v659 = vld [vmem:[%s561 + $0xa0] sm:$0xff]
        %v660 = vld [vmem:[%s561 + $0xa8] sm:$0xff]
        %v661 = vld [vmem:[%s561 + $0xb0] sm:$0xff]
        %v662 = vld [vmem:[%s561 + $0xb8] sm:$0xff]
        %v663 = vld [vmem:[%s561 + $0xc0] sm:$0xff]
        %v664 = vld [vmem:[%s561 + $0xc8] sm:$0xff]
        %v665 = vld [vmem:[%s561 + $0xd0] sm:$0xff]
        %v666 = vld [vmem:[%s561 + $0xd8] sm:$0xff]
        %v667 = vld [vmem:[%s561 + $0xe0] sm:$0xff]
        %v668 = vld [vmem:[%s561 + $0xe8] sm:$0xff]
        %v669 = vld [vmem:[%s561 + $0xf0] sm:$0xff]
        %v670 = vld [vmem:[%s561 + $0xf8] sm:$0xff]
        %v671 = vld [vmem:[%s568] sm:$0xff]
        %v672 = vld [vmem:[%s568 + $0x8] sm:$0xff]
        %v673 = vld [vmem:[%s568 + $0x10] sm:$0xff]
        %v674 = vld [vmem:[%s568 + $0x18] sm:$0xff]
        %v675 = vadd.f32 %v639, %v640
        %v676 = vadd.f32 %v641, %v642
        %v677 = vadd.f32 %v643, %v644
        %v678 = vadd.f32 %v645, %v646
        %v679 = vadd.f32 %v647, %v648
        %v680 = vadd.f32 %v649, %v650
        %v681 = vadd.f32 %v651, %v652
        %v682 = vadd.f32 %v653, %v654
        %v683 = vadd.f32 %v671, %v672
        %v684 = vadd.f32 %v675, %v655
        %v685 = vadd.f32 %v676, %v657
        %v686 = vadd.f32 %v677, %v659
        %v687 = vadd.f32 %v678, %v661
        %v688 = vadd.f32 %v679, %v663
        %v689 = vadd.f32 %v680, %v665
        %v690 = vadd.f32 %v681, %v667
        %v691 = vadd.f32 %v682, %v669
        %v692 = vadd.f32 %v683, %v673
        %v693 = vadd.f32 %v684, %v656
        %v694 = vadd.f32 %v685, %v658
        %v695 = vadd.f32 %v686, %v660
        %v696 = vadd.f32 %v687, %v662
        %v697 = vadd.f32 %v688, %v664
        %v698 = vadd.f32 %v689, %v666
        %v699 = vadd.f32 %v690, %v668
        %v700 = vadd.f32 %v691, %v670
        %v701 = vadd.f32 %v692, %v674
        %v702 = vmul.f32 %v693, 0.25
        %v703 = vmul.f32 %v694, 0.25
        %v704 = vmul.f32 %v695, 0.25
        %v705 = vmul.f32 %v696, 0.25
        %v706 = vmul.f32 %v697, 0.25
        %v707 = vmul.f32 %v698, 0.25
        %v708 = vmul.f32 %v699, 0.25
        %v709 = vmul.f32 %v700, 0.25
        %v710 = vmul.f32 %v701, 0.25
        %v711 = vadd.f32 %v655, %v656
        %v712 = vadd.f32 %v657, %v658
        %v713 = vadd.f32 %v659, %v660
        %v714 = vadd.f32 %v661, %v662
        %v715 = vadd.f32 %v663, %v664
        %v716 = vadd.f32 %v665, %v666
        %v717 = vadd.f32 %v667, %v668
        %v718 = vadd.f32 %v669, %v670
        %v719 = vadd.f32 %v673, %v674
        %v729 = vrot.slane %v639, 1
        %v730 = vrot.slane %v641, 1
        %v731 = vrot.slane %v643, 1
        %v732 = vrot.slane %v645, 1
        %v733 = vrot.slane %v647, 1
        %v734 = vrot.slane %v649, 1
        %v735 = vrot.slane %v651, 1
        %v736 = vrot.slane %v653, 1
        %v737 = vrot.slane %v671, 1
        %v747 = vadd.f32 %v711, %v729
        %v748 = vadd.f32 %v712, %v730
        %v749 = vadd.f32 %v713, %v731
        %v750 = vadd.f32 %v714, %v732
        %v751 = vadd.f32 %v715, %v733
        %v752 = vadd.f32 %v716, %v734
        %v753 = vadd.f32 %v717, %v735
        %v754 = vadd.f32 %v718, %v736
        %v755 = vadd.f32 %v719, %v737
        %v765 = vrot.slane %v640, 1
        %v766 = vrot.slane %v642, 1
        %v767 = vrot.slane %v644, 1
        %v768 = vrot.slane %v646, 1
        %v769 = vrot.slane %v648, 1
        %v770 = vrot.slane %v650, 1
        %v771 = vrot.slane %v652, 1
        %v772 = vrot.slane %v654, 1
        %v773 = vrot.slane %v672, 1
        %v783 = vadd.f32 %v747, %v765
        %v784 = vadd.f32 %v748, %v766
        %v785 = vadd.f32 %v749, %v767
        %v786 = vadd.f32 %v750, %v768
        %v787 = vadd.f32 %v751, %v769
        %v788 = vadd.f32 %v752, %v770
        %v789 = vadd.f32 %v753, %v771
        %v790 = vadd.f32 %v754, %v772
        %v791 = vadd.f32 %v755, %v773
        %v792 = vmul.f32 %v783, 0.25
        %v793 = vmul.f32 %v784, 0.25
        %v794 = vmul.f32 %v785, 0.25
        %v795 = vmul.f32 %v786, 0.25
        %v796 = vmul.f32 %v787, 0.25
        %v797 = vmul.f32 %v788, 0.25
        %v798 = vmul.f32 %v789, 0.25
        %v799 = vmul.f32 %v790, 0.25
        %v800 = vmul.f32 %v791, 0.25
        %v801 = vadd.f32 %v640, %v656
        %v802 = vadd.f32 %v642, %v658
        %v803 = vadd.f32 %v644, %v660
        %v804 = vadd.f32 %v646, %v662
        %v805 = vadd.f32 %v648, %v664
        %v806 = vadd.f32 %v650, %v666
        %v807 = vadd.f32 %v652, %v668
        %v808 = vadd.f32 %v654, %v670
        %v809 = vadd.f32 %v801, %v641
        %v810 = vadd.f32 %v802, %v643
        %v811 = vadd.f32 %v803, %v645
        %v812 = vadd.f32 %v804, %v647
        %v813 = vadd.f32 %v805, %v649
        %v814 = vadd.f32 %v806, %v651
        %v815 = vadd.f32 %v807, %v653
        %v816 = vadd.f32 %v808, %v671
        %v817 = vadd.f32 %v809, %v657
        %v818 = vadd.f32 %v810, %v659
        %v819 = vadd.f32 %v811, %v661
        %v820 = vadd.f32 %v812, %v663
        %v821 = vadd.f32 %v813, %v665
        %v822 = vadd.f32 %v814, %v667
        %v823 = vadd.f32 %v815, %v669
        %v824 = vadd.f32 %v816, %v673
        %v825 = vmul.f32 %v817, 0.25
        %v826 = vmul.f32 %v818, 0.25
        %v827 = vmul.f32 %v819, 0.25
        %v828 = vmul.f32 %v820, 0.25
        %v829 = vmul.f32 %v821, 0.25
        %v830 = vmul.f32 %v822, 0.25
        %v831 = vmul.f32 %v823, 0.25
        %v832 = vmul.f32 %v824, 0.25
        %v833 = vadd.f32 %v656, %v657
        %v834 = vadd.f32 %v658, %v659
        %v835 = vadd.f32 %v660, %v661
        %v836 = vadd.f32 %v662, %v663
        %v837 = vadd.f32 %v664, %v665
        %v838 = vadd.f32 %v666, %v667
        %v839 = vadd.f32 %v668, %v669
        %v840 = vadd.f32 %v670, %v673
        %v841 = vadd.f32 %v833, %v765
        %v842 = vadd.f32 %v834, %v766
        %v843 = vadd.f32 %v835, %v767
        %v844 = vadd.f32 %v836, %v768
        %v845 = vadd.f32 %v837, %v769
        %v846 = vadd.f32 %v838, %v770
        %v847 = vadd.f32 %v839, %v771
        %v848 = vadd.f32 %v840, %v772
        %v849 = vadd.f32 %v841, %v730
        %v850 = vadd.f32 %v842, %v731
        %v851 = vadd.f32 %v843, %v732
        %v852 = vadd.f32 %v844, %v733
        %v853 = vadd.f32 %v845, %v734
        %v854 = vadd.f32 %v846, %v735
        %v855 = vadd.f32 %v847, %v736
        %v856 = vadd.f32 %v848, %v737
        %v857 = vmul.f32 %v849, 0.25
        %v858 = vmul.f32 %v850, 0.25
        %v859 = vmul.f32 %v851, 0.25
        %v860 = vmul.f32 %v852, 0.25
        %v861 = vmul.f32 %v853, 0.25
        %v862 = vmul.f32 %v854, 0.25
        %v863 = vmul.f32 %v855, 0.25
        %v864 = vmul.f32 %v856, 0.25
        %v865 = vld [vmem:[%s624] sm:$0x1]
        %v866 = vld [vmem:[%s624 + $0x1] sm:$0x1]
        %v867 = vld [vmem:[%s624 + $0x2] sm:$0x1]
        %v868 = vld [vmem:[%s624 + $0x3] sm:$0x1]
        %v869 = vld [vmem:[%s624 + $0x4] sm:$0x1]
        %v870 = vld [vmem:[%s624 + $0x5] sm:$0x1]
        %v871 = vld [vmem:[%s624 + $0x6] sm:$0x1]
        %v872 = vld [vmem:[%s624 + $0x7] sm:$0x1]
        %v873 = vld [vmem:[%s624 + $0x8] sm:$0x1]
        %vm874 = vcmp.ne.s32.totalorder %v865, 0
        %vm875 = vcmp.ne.s32.totalorder %v866, 0
        %vm876 = vcmp.ne.s32.totalorder %v867, 0
        %vm877 = vcmp.ne.s32.totalorder %v868, 0
        %vm878 = vcmp.ne.s32.totalorder %v869, 0
        %vm879 = vcmp.ne.s32.totalorder %v870, 0
        %vm880 = vcmp.ne.s32.totalorder %v871, 0
        %vm881 = vcmp.ne.s32.totalorder %v872, 0
        %vm882 = vcmp.ne.s32.totalorder %v873, 0
        %v883 = vld [vmem:[%s628] sm:$0x1]
        %v884 = vld [vmem:[%s628 + $0x1] sm:$0x1]
        %v885 = vld [vmem:[%s628 + $0x2] sm:$0x1]
        %v886 = vld [vmem:[%s628 + $0x3] sm:$0x1]
        %v887 = vld [vmem:[%s628 + $0x4] sm:$0x1]
        %v888 = vld [vmem:[%s628 + $0x5] sm:$0x1]
        %v889 = vld [vmem:[%s628 + $0x6] sm:$0x1]
        %v890 = vld [vmem:[%s628 + $0x7] sm:$0x1]
        %vm891 = vcmp.ne.s32.totalorder %v883, 0
        %vm892 = vcmp.ne.s32.totalorder %v884, 0
        %vm893 = vcmp.ne.s32.totalorder %v885, 0
        %vm894 = vcmp.ne.s32.totalorder %v886, 0
        %vm895 = vcmp.ne.s32.totalorder %v887, 0
        %vm896 = vcmp.ne.s32.totalorder %v888, 0
        %vm897 = vcmp.ne.s32.totalorder %v889, 0
        %vm898 = vcmp.ne.s32.totalorder %v890, 0
        %v899 = vsel %vm874, 1, 0
        %v900 = vsel %vm875, 1, 0
        %v901 = vsel %vm876, 1, 0
        %v902 = vsel %vm877, 1, 0
        %v903 = vsel %vm878, 1, 0
        %v904 = vsel %vm879, 1, 0
        %v905 = vsel %vm880, 1, 0
        %v906 = vsel %vm881, 1, 0
        %v907 = vsel %vm882, 1, 0
        %v908 = vlaneseq
        %v909 = vshrl.u32 %v908, 7
        %v910 = vsub.s32 0, %v909
        %v911 = vrot.slane %v899, %v910
        %v912 = vlaneseq
        %v913 = vshrl.u32 %v912, 7
        %v914 = vsub.s32 0, %v913
        %v915 = vrot.slane %v900, %v914
        %v916 = vlaneseq
        %v917 = vshrl.u32 %v916, 7
        %v918 = vsub.s32 0, %v917
        %v919 = vrot.slane %v901, %v918
        %v920 = vlaneseq
        %v921 = vshrl.u32 %v920, 7
        %v922 = vsub.s32 0, %v921
        %v923 = vrot.slane %v902, %v922
        %v924 = vlaneseq
        %v925 = vshrl.u32 %v924, 7
        %v926 = vsub.s32 0, %v925
        %v927 = vrot.slane %v903, %v926
        %v928 = vlaneseq
        %v929 = vshrl.u32 %v928, 7
        %v930 = vsub.s32 0, %v929
        %v931 = vrot.slane %v904, %v930
        %v932 = vlaneseq
        %v933 = vshrl.u32 %v932, 7
        %v934 = vsub.s32 0, %v933
        %v935 = vrot.slane %v905, %v934
        %v936 = vlaneseq
        %v937 = vshrl.u32 %v936, 7
        %v938 = vsub.s32 0, %v937
        %v939 = vrot.slane %v906, %v938
        %v940 = vlaneseq
        %v941 = vshrl.u32 %v940, 7
        %v942 = vsub.s32 0, %v941
        %v943 = vrot.slane %v907, %v942
        %944 = vset.pattern.permute.xlu0 0
        %945 = vperm.xlu0 %944, %v911
        %v946 = vpop.permute.xlu0 %945
        %947 = vset.pattern.permute.xlu0 0
        %948 = vperm.xlu0 %947, %v915
        %v949 = vpop.permute.xlu0 %948
        %950 = vset.pattern.permute.xlu0 0
        %951 = vperm.xlu0 %950, %v919
        %v952 = vpop.permute.xlu0 %951
        %953 = vset.pattern.permute.xlu0 0
        %954 = vperm.xlu0 %953, %v923
        %v955 = vpop.permute.xlu0 %954
        %956 = vset.pattern.permute.xlu0 0
        %957 = vperm.xlu0 %956, %v927
        %v958 = vpop.permute.xlu0 %957
        %959 = vset.pattern.permute.xlu0 0
        %960 = vperm.xlu0 %959, %v931
        %v961 = vpop.permute.xlu0 %960
        %962 = vset.pattern.permute.xlu0 0
        %963 = vperm.xlu0 %962, %v935
        %v964 = vpop.permute.xlu0 %963
        %965 = vset.pattern.permute.xlu0 0
        %966 = vperm.xlu0 %965, %v939
        %v967 = vpop.permute.xlu0 %966
        %968 = vset.pattern.permute.xlu0 0
        %969 = vperm.xlu0 %968, %v943
        %v970 = vpop.permute.xlu0 %969
        %vm971 = vcmp.eq.s32.totalorder %v946, 1
        %vm972 = vcmp.eq.s32.totalorder %v949, 1
        %vm973 = vcmp.eq.s32.totalorder %v952, 1
        %vm974 = vcmp.eq.s32.totalorder %v955, 1
        %vm975 = vcmp.eq.s32.totalorder %v958, 1
        %vm976 = vcmp.eq.s32.totalorder %v961, 1
        %vm977 = vcmp.eq.s32.totalorder %v964, 1
        %vm978 = vcmp.eq.s32.totalorder %v967, 1
        %vm979 = vcmp.eq.s32.totalorder %v970, 1
        %v980 = vsel %vm971, %v702, 0.0
        %v981 = vsel %vm972, %v703, 0.0
        %v982 = vsel %vm973, %v704, 0.0
        %v983 = vsel %vm974, %v705, 0.0
        %v984 = vsel %vm975, %v706, 0.0
        %v985 = vsel %vm976, %v707, 0.0
        %v986 = vsel %vm977, %v708, 0.0
        %v987 = vsel %vm978, %v709, 0.0
        %v988 = vsel %vm979, %v710, 0.0
        %v989 = vsel %vm971, %v792, 0.0
        %v990 = vsel %vm972, %v793, 0.0
        %v991 = vsel %vm973, %v794, 0.0
        %v992 = vsel %vm974, %v795, 0.0
        %v993 = vsel %vm975, %v796, 0.0
        %v994 = vsel %vm976, %v797, 0.0
        %v995 = vsel %vm977, %v798, 0.0
        %v996 = vsel %vm978, %v799, 0.0
        %v997 = vsel %vm979, %v800, 0.0
        %v998 = vsel %vm891, 1, 0
        %v999 = vsel %vm892, 1, 0
        %v1000 = vsel %vm893, 1, 0
        %v1001 = vsel %vm894, 1, 0
        %v1002 = vsel %vm895, 1, 0
        %v1003 = vsel %vm896, 1, 0
        %v1004 = vsel %vm897, 1, 0
        %v1005 = vsel %vm898, 1, 0
        %v1006 = vlaneseq
        %v1007 = vshrl.u32 %v1006, 7
        %v1008 = vsub.s32 0, %v1007
        %v1009 = vrot.slane %v998, %v1008
        %v1010 = vlaneseq
        %v1011 = vshrl.u32 %v1010, 7
        %v1012 = vsub.s32 0, %v1011
        %v1013 = vrot.slane %v999, %v1012
        %v1014 = vlaneseq
        %v1015 = vshrl.u32 %v1014, 7
        %v1016 = vsub.s32 0, %v1015
        %v1017 = vrot.slane %v1000, %v1016
        %v1018 = vlaneseq
        %v1019 = vshrl.u32 %v1018, 7
        %v1020 = vsub.s32 0, %v1019
        %v1021 = vrot.slane %v1001, %v1020
        %v1022 = vlaneseq
        %v1023 = vshrl.u32 %v1022, 7
        %v1024 = vsub.s32 0, %v1023
        %v1025 = vrot.slane %v1002, %v1024
        %v1026 = vlaneseq
        %v1027 = vshrl.u32 %v1026, 7
        %v1028 = vsub.s32 0, %v1027
        %v1029 = vrot.slane %v1003, %v1028
        %v1030 = vlaneseq
        %v1031 = vshrl.u32 %v1030, 7
        %v1032 = vsub.s32 0, %v1031
        %v1033 = vrot.slane %v1004, %v1032
        %v1034 = vlaneseq
        %v1035 = vshrl.u32 %v1034, 7
        %v1036 = vsub.s32 0, %v1035
        %v1037 = vrot.slane %v1005, %v1036
        %1038 = vset.pattern.permute.xlu0 0
        %1039 = vperm.xlu0 %1038, %v1009
        %v1040 = vpop.permute.xlu0 %1039
        %1041 = vset.pattern.permute.xlu0 0
        %1042 = vperm.xlu0 %1041, %v1013
        %v1043 = vpop.permute.xlu0 %1042
        %1044 = vset.pattern.permute.xlu0 0
        %1045 = vperm.xlu0 %1044, %v1017
        %v1046 = vpop.permute.xlu0 %1045
        %1047 = vset.pattern.permute.xlu0 0
        %1048 = vperm.xlu0 %1047, %v1021
        %v1049 = vpop.permute.xlu0 %1048
        %1050 = vset.pattern.permute.xlu0 0
        %1051 = vperm.xlu0 %1050, %v1025
        %v1052 = vpop.permute.xlu0 %1051
        %1053 = vset.pattern.permute.xlu0 0
        %1054 = vperm.xlu0 %1053, %v1029
        %v1055 = vpop.permute.xlu0 %1054
        %1056 = vset.pattern.permute.xlu0 0
        %1057 = vperm.xlu0 %1056, %v1033
        %v1058 = vpop.permute.xlu0 %1057
        %1059 = vset.pattern.permute.xlu0 0
        %1060 = vperm.xlu0 %1059, %v1037
        %v1061 = vpop.permute.xlu0 %1060
        %vm1062 = vcmp.eq.s32.totalorder %v1040, 1
        %vm1063 = vcmp.eq.s32.totalorder %v1043, 1
        %vm1064 = vcmp.eq.s32.totalorder %v1046, 1
        %vm1065 = vcmp.eq.s32.totalorder %v1049, 1
        %vm1066 = vcmp.eq.s32.totalorder %v1052, 1
        %vm1067 = vcmp.eq.s32.totalorder %v1055, 1
        %vm1068 = vcmp.eq.s32.totalorder %v1058, 1
        %vm1069 = vcmp.eq.s32.totalorder %v1061, 1
        %v1070 = vsel %vm1062, %v825, 0.0
        %v1071 = vsel %vm1063, %v826, 0.0
        %v1072 = vsel %vm1064, %v827, 0.0
        %v1073 = vsel %vm1065, %v828, 0.0
        %v1074 = vsel %vm1066, %v829, 0.0
        %v1075 = vsel %vm1067, %v830, 0.0
        %v1076 = vsel %vm1068, %v831, 0.0
        %v1077 = vsel %vm1069, %v832, 0.0
        %v1078 = vsel %vm1062, %v857, 0.0
        %v1079 = vsel %vm1063, %v858, 0.0
        %v1080 = vsel %vm1064, %v859, 0.0
        %v1081 = vsel %vm1065, %v860, 0.0
        %v1082 = vsel %vm1066, %v861, 0.0
        %v1083 = vsel %vm1067, %v862, 0.0
        %v1084 = vsel %vm1068, %v863, 0.0
        %v1085 = vsel %vm1069, %v864, 0.0
        %v1095 = vrot.slane %v989, 7
        %v1096 = vrot.slane %v990, 7
        %v1097 = vrot.slane %v991, 7
        %v1098 = vrot.slane %v992, 7
        %v1099 = vrot.slane %v993, 7
        %v1100 = vrot.slane %v994, 7
        %v1101 = vrot.slane %v995, 7
        %v1102 = vrot.slane %v996, 7
        %v1103 = vrot.slane %v997, 7
        %vm1113 = vcmask 1040384
        %v1114 = vsel %vm1113, 0.0, %v1095
        %v1115 = vsel %vm1113, 0.0, %v1096
        %v1116 = vsel %vm1113, 0.0, %v1097
        %v1117 = vsel %vm1113, 0.0, %v1098
        %v1118 = vsel %vm1113, 0.0, %v1099
        %v1119 = vsel %vm1113, 0.0, %v1100
        %v1120 = vsel %vm1113, 0.0, %v1101
        %v1121 = vsel %vm1113, 0.0, %v1102
        %v1122 = vsel %vm1113, 0.0, %v1103
        %vm1123 = vcmask 1046528
        %v1124 = vsel %vm1123, %v989, 0.0
        %v1125 = vsel %vm1123, %v990, 0.0
        %v1126 = vsel %vm1123, %v991, 0.0
        %v1127 = vsel %vm1123, %v992, 0.0
        %v1128 = vsel %vm1123, %v993, 0.0
        %v1129 = vsel %vm1123, %v994, 0.0
        %v1130 = vsel %vm1123, %v995, 0.0
        %v1131 = vsel %vm1123, %v996, 0.0
        %v1132 = vsel %vm1123, %v997, 0.0
        %v1141 = vrot.slane %v1078, 7
        %v1142 = vrot.slane %v1079, 7
        %v1143 = vrot.slane %v1080, 7
        %v1144 = vrot.slane %v1081, 7
        %v1145 = vrot.slane %v1082, 7
        %v1146 = vrot.slane %v1083, 7
        %v1147 = vrot.slane %v1084, 7
        %v1148 = vrot.slane %v1085, 7
        %v1157 = vsel %vm1113, 0.0, %v1141
        %v1158 = vsel %vm1113, 0.0, %v1142
        %v1159 = vsel %vm1113, 0.0, %v1143
        %v1160 = vsel %vm1113, 0.0, %v1144
        %v1161 = vsel %vm1113, 0.0, %v1145
        %v1162 = vsel %vm1113, 0.0, %v1146
        %v1163 = vsel %vm1113, 0.0, %v1147
        %v1164 = vsel %vm1113, 0.0, %v1148
        %v1165 = vsel %vm1123, %v1078, 0.0
        %v1166 = vsel %vm1123, %v1079, 0.0
        %v1167 = vsel %vm1123, %v1080, 0.0
        %v1168 = vsel %vm1123, %v1081, 0.0
        %v1169 = vsel %vm1123, %v1082, 0.0
        %v1170 = vsel %vm1123, %v1083, 0.0
        %v1171 = vsel %vm1123, %v1084, 0.0
        %v1172 = vsel %vm1123, %v1085, 0.0
        %v1173 = vsel %vm971, %v702, -1e+30
        %v1174 = vsel %vm972, %v703, -1e+30
        %v1175 = vsel %vm973, %v704, -1e+30
        %v1176 = vsel %vm974, %v705, -1e+30
        %v1177 = vsel %vm975, %v706, -1e+30
        %v1178 = vsel %vm976, %v707, -1e+30
        %v1179 = vsel %vm977, %v708, -1e+30
        %v1180 = vsel %vm978, %v709, -1e+30
        %v1181 = vsel %vm979, %v710, -1e+30
        %v1182 = vsel %vm971, %v792, -1e+30
        %v1183 = vsel %vm972, %v793, -1e+30
        %v1184 = vsel %vm973, %v794, -1e+30
        %v1185 = vsel %vm974, %v795, -1e+30
        %v1186 = vsel %vm975, %v796, -1e+30
        %v1187 = vsel %vm976, %v797, -1e+30
        %v1188 = vsel %vm977, %v798, -1e+30
        %v1189 = vsel %vm978, %v799, -1e+30
        %v1190 = vsel %vm979, %v800, -1e+30
        %v1191 = vsel %vm1062, %v825, -1e+30
        %v1192 = vsel %vm1063, %v826, -1e+30
        %v1193 = vsel %vm1064, %v827, -1e+30
        %v1194 = vsel %vm1065, %v828, -1e+30
        %v1195 = vsel %vm1066, %v829, -1e+30
        %v1196 = vsel %vm1067, %v830, -1e+30
        %v1197 = vsel %vm1068, %v831, -1e+30
        %v1198 = vsel %vm1069, %v832, -1e+30
        %v1199 = vsel %vm1062, %v857, -1e+30
        %v1200 = vsel %vm1063, %v858, -1e+30
        %v1201 = vsel %vm1064, %v859, -1e+30
        %v1202 = vsel %vm1065, %v860, -1e+30
        %v1203 = vsel %vm1066, %v861, -1e+30
        %v1204 = vsel %vm1067, %v862, -1e+30
        %v1205 = vsel %vm1068, %v863, -1e+30
        %v1206 = vsel %vm1069, %v864, -1e+30
        %v1216 = vrot.slane %v1182, 7
        %v1217 = vrot.slane %v1183, 7
        %v1218 = vrot.slane %v1184, 7
        %v1219 = vrot.slane %v1185, 7
        %v1220 = vrot.slane %v1186, 7
        %v1221 = vrot.slane %v1187, 7
        %v1222 = vrot.slane %v1188, 7
        %v1223 = vrot.slane %v1189, 7
        %v1224 = vrot.slane %v1190, 7
        %1225 = vrot.lane.b32.xlu0 %v1216, 126
        %v1226 = vpop.permute.xlu0 %1225
        %1227 = vrot.lane.b32.xlu0 %v1217, 126
        %v1228 = vpop.permute.xlu0 %1227
        %1229 = vrot.lane.b32.xlu0 %v1218, 126
        %v1230 = vpop.permute.xlu0 %1229
        %1231 = vrot.lane.b32.xlu0 %v1219, 126
        %v1232 = vpop.permute.xlu0 %1231
        %1233 = vrot.lane.b32.xlu0 %v1220, 126
        %v1234 = vpop.permute.xlu0 %1233
        %1235 = vrot.lane.b32.xlu0 %v1221, 126
        %v1236 = vpop.permute.xlu0 %1235
        %1237 = vrot.lane.b32.xlu0 %v1222, 126
        %v1238 = vpop.permute.xlu0 %1237
        %1239 = vrot.lane.b32.xlu0 %v1223, 126
        %v1240 = vpop.permute.xlu0 %1239
        %1241 = vrot.lane.b32.xlu0 %v1224, 126
        %v1242 = vpop.permute.xlu0 %1241
        %v1252 = vsel %vm1113, -1e+30, %v1226
        %v1253 = vsel %vm1113, -1e+30, %v1228
        %v1254 = vsel %vm1113, -1e+30, %v1230
        %v1255 = vsel %vm1113, -1e+30, %v1232
        %v1256 = vsel %vm1113, -1e+30, %v1234
        %v1257 = vsel %vm1113, -1e+30, %v1236
        %v1258 = vsel %vm1113, -1e+30, %v1238
        %v1259 = vsel %vm1113, -1e+30, %v1240
        %v1260 = vsel %vm1113, -1e+30, %v1242
        %v1261 = vsel %vm1123, %v1182, -1e+30
        %v1262 = vsel %vm1123, %v1183, -1e+30
        %v1263 = vsel %vm1123, %v1184, -1e+30
        %v1264 = vsel %vm1123, %v1185, -1e+30
        %v1265 = vsel %vm1123, %v1186, -1e+30
        %v1266 = vsel %vm1123, %v1187, -1e+30
        %v1267 = vsel %vm1123, %v1188, -1e+30
        %v1268 = vsel %vm1123, %v1189, -1e+30
        %v1269 = vsel %vm1123, %v1190, -1e+30
        %v1278 = vrot.slane %v1199, 7
        %v1279 = vrot.slane %v1200, 7
        %v1280 = vrot.slane %v1201, 7
        %v1281 = vrot.slane %v1202, 7
        %v1282 = vrot.slane %v1203, 7
        %v1283 = vrot.slane %v1204, 7
        %v1284 = vrot.slane %v1205, 7
        %v1285 = vrot.slane %v1206, 7
        %1286 = vrot.lane.b32.xlu0 %v1278, 126
        %v1287 = vpop.permute.xlu0 %1286
        %1288 = vrot.lane.b32.xlu0 %v1279, 126
        %v1289 = vpop.permute.xlu0 %1288
        %1290 = vrot.lane.b32.xlu0 %v1280, 126
        %v1291 = vpop.permute.xlu0 %1290
        %1292 = vrot.lane.b32.xlu0 %v1281, 126
        %v1293 = vpop.permute.xlu0 %1292
        %1294 = vrot.lane.b32.xlu0 %v1282, 126
        %v1295 = vpop.permute.xlu0 %1294
        %1296 = vrot.lane.b32.xlu0 %v1283, 126
        %v1297 = vpop.permute.xlu0 %1296
        %1298 = vrot.lane.b32.xlu0 %v1284, 126
        %v1299 = vpop.permute.xlu0 %1298
        %1300 = vrot.lane.b32.xlu0 %v1285, 126
        %v1301 = vpop.permute.xlu0 %1300
        %v1310 = vsel %vm1113, -1e+30, %v1287
        %v1311 = vsel %vm1113, -1e+30, %v1289
        %v1312 = vsel %vm1113, -1e+30, %v1291
        %v1313 = vsel %vm1113, -1e+30, %v1293
        %v1314 = vsel %vm1113, -1e+30, %v1295
        %v1315 = vsel %vm1113, -1e+30, %v1297
        %v1316 = vsel %vm1113, -1e+30, %v1299
        %v1317 = vsel %vm1113, -1e+30, %v1301
        %v1318 = vsel %vm1123, %v1199, -1e+30
        %v1319 = vsel %vm1123, %v1200, -1e+30
        %v1320 = vsel %vm1123, %v1201, -1e+30
        %v1321 = vsel %vm1123, %v1202, -1e+30
        %v1322 = vsel %vm1123, %v1203, -1e+30
        %v1323 = vsel %vm1123, %v1204, -1e+30
        %v1324 = vsel %vm1123, %v1205, -1e+30
        %v1325 = vsel %vm1123, %v1206, -1e+30
        %1334 = vrot.lane.b32.xlu0 %v1173, 126
        %v1335 = vpop.permute.xlu0 %1334
        %1336 = vrot.lane.b32.xlu0 %v1174, 126
        %v1337 = vpop.permute.xlu0 %1336
        %1338 = vrot.lane.b32.xlu0 %v1175, 126
        %v1339 = vpop.permute.xlu0 %1338
        %1340 = vrot.lane.b32.xlu0 %v1176, 126
        %v1341 = vpop.permute.xlu0 %1340
        %1342 = vrot.lane.b32.xlu0 %v1177, 126
        %v1343 = vpop.permute.xlu0 %1342
        %1344 = vrot.lane.b32.xlu0 %v1178, 126
        %v1345 = vpop.permute.xlu0 %1344
        %1346 = vrot.lane.b32.xlu0 %v1179, 126
        %v1347 = vpop.permute.xlu0 %1346
        %1348 = vrot.lane.b32.xlu0 %v1180, 126
        %v1349 = vpop.permute.xlu0 %1348
        %v1358 = vmax.f32 %v1252, %v1335
        %v1359 = vmax.f32 %v1253, %v1337
        %v1360 = vmax.f32 %v1254, %v1339
        %v1361 = vmax.f32 %v1255, %v1341
        %v1362 = vmax.f32 %v1256, %v1343
        %v1363 = vmax.f32 %v1257, %v1345
        %v1364 = vmax.f32 %v1258, %v1347
        %v1365 = vmax.f32 %v1259, %v1349
        %1374 = vrot.lane.b32.xlu0 %v1261, 126
        %v1375 = vpop.permute.xlu0 %1374
        %1376 = vrot.lane.b32.xlu0 %v1262, 126
        %v1377 = vpop.permute.xlu0 %1376
        %1378 = vrot.lane.b32.xlu0 %v1263, 126
        %v1379 = vpop.permute.xlu0 %1378
        %1380 = vrot.lane.b32.xlu0 %v1264, 126
        %v1381 = vpop.permute.xlu0 %1380
        %1382 = vrot.lane.b32.xlu0 %v1265, 126
        %v1383 = vpop.permute.xlu0 %1382
        %1384 = vrot.lane.b32.xlu0 %v1266, 126
        %v1385 = vpop.permute.xlu0 %1384
        %1386 = vrot.lane.b32.xlu0 %v1267, 126
        %v1387 = vpop.permute.xlu0 %1386
        %1388 = vrot.lane.b32.xlu0 %v1268, 126
        %v1389 = vpop.permute.xlu0 %1388
        %v1398 = vmax.f32 %v1358, %v1375
        %v1399 = vmax.f32 %v1359, %v1377
        %v1400 = vmax.f32 %v1360, %v1379
        %v1401 = vmax.f32 %v1361, %v1381
        %v1402 = vmax.f32 %v1362, %v1383
        %v1403 = vmax.f32 %v1363, %v1385
        %v1404 = vmax.f32 %v1364, %v1387
        %v1405 = vmax.f32 %v1365, %v1389
        %v1406 = vmax.f32 %v1398, %v1310
        %v1407 = vmax.f32 %v1399, %v1311
        %v1408 = vmax.f32 %v1400, %v1312
        %v1409 = vmax.f32 %v1401, %v1313
        %v1410 = vmax.f32 %v1402, %v1314
        %v1411 = vmax.f32 %v1403, %v1315
        %v1412 = vmax.f32 %v1404, %v1316
        %v1413 = vmax.f32 %v1405, %v1317
        %1422 = vrot.lane.b32.xlu0 %v1191, 126
        %v1423 = vpop.permute.xlu0 %1422
        %1424 = vrot.lane.b32.xlu0 %v1192, 126
        %v1425 = vpop.permute.xlu0 %1424
        %1426 = vrot.lane.b32.xlu0 %v1193, 126
        %v1427 = vpop.permute.xlu0 %1426
        %1428 = vrot.lane.b32.xlu0 %v1194, 126
        %v1429 = vpop.permute.xlu0 %1428
        %1430 = vrot.lane.b32.xlu0 %v1195, 126
        %v1431 = vpop.permute.xlu0 %1430
        %1432 = vrot.lane.b32.xlu0 %v1196, 126
        %v1433 = vpop.permute.xlu0 %1432
        %1434 = vrot.lane.b32.xlu0 %v1197, 126
        %v1435 = vpop.permute.xlu0 %1434
        %1436 = vrot.lane.b32.xlu0 %v1198, 126
        %v1437 = vpop.permute.xlu0 %1436
        %v1446 = vmax.f32 %v1406, %v1423
        %v1447 = vmax.f32 %v1407, %v1425
        %v1448 = vmax.f32 %v1408, %v1427
        %v1449 = vmax.f32 %v1409, %v1429
        %v1450 = vmax.f32 %v1410, %v1431
        %v1451 = vmax.f32 %v1411, %v1433
        %v1452 = vmax.f32 %v1412, %v1435
        %v1453 = vmax.f32 %v1413, %v1437
        %1462 = vrot.lane.b32.xlu0 %v1318, 126
        %v1463 = vpop.permute.xlu0 %1462
        %1464 = vrot.lane.b32.xlu0 %v1319, 126
        %v1465 = vpop.permute.xlu0 %1464
        %1466 = vrot.lane.b32.xlu0 %v1320, 126
        %v1467 = vpop.permute.xlu0 %1466
        %1468 = vrot.lane.b32.xlu0 %v1321, 126
        %v1469 = vpop.permute.xlu0 %1468
        %1470 = vrot.lane.b32.xlu0 %v1322, 126
        %v1471 = vpop.permute.xlu0 %1470
        %1472 = vrot.lane.b32.xlu0 %v1323, 126
        %v1473 = vpop.permute.xlu0 %1472
        %1474 = vrot.lane.b32.xlu0 %v1324, 126
        %v1475 = vpop.permute.xlu0 %1474
        %1476 = vrot.lane.b32.xlu0 %v1325, 126
        %v1477 = vpop.permute.xlu0 %1476
        %v1486 = vmax.f32 %v1446, %v1463
        %v1487 = vmax.f32 %v1447, %v1465
        %v1488 = vmax.f32 %v1448, %v1467
        %v1489 = vmax.f32 %v1449, %v1469
        %v1490 = vmax.f32 %v1450, %v1471
        %v1491 = vmax.f32 %v1451, %v1473
        %v1492 = vmax.f32 %v1452, %v1475
        %v1493 = vmax.f32 %v1453, %v1477
        %v1494 = vmax.f32 %v1486, %v1253
        %v1495 = vmax.f32 %v1487, %v1254
        %v1496 = vmax.f32 %v1488, %v1255
        %v1497 = vmax.f32 %v1489, %v1256
        %v1498 = vmax.f32 %v1490, %v1257
        %v1499 = vmax.f32 %v1491, %v1258
        %v1500 = vmax.f32 %v1492, %v1259
        %v1501 = vmax.f32 %v1493, %v1260
        %1503 = vrot.lane.b32.xlu0 %v1181, 126
        %v1504 = vpop.permute.xlu0 %1503
        %v1506 = vmax.f32 %v1494, %v1337
        %v1507 = vmax.f32 %v1495, %v1339
        %v1508 = vmax.f32 %v1496, %v1341
        %v1509 = vmax.f32 %v1497, %v1343
        %v1510 = vmax.f32 %v1498, %v1345
        %v1511 = vmax.f32 %v1499, %v1347
        %v1512 = vmax.f32 %v1500, %v1349
        %v1513 = vmax.f32 %v1501, %v1504
        %1515 = vrot.lane.b32.xlu0 %v1269, 126
        %v1516 = vpop.permute.xlu0 %1515
        %v1518 = vmax.f32 %v1506, %v1377
        %v1519 = vmax.f32 %v1507, %v1379
        %v1520 = vmax.f32 %v1508, %v1381
        %v1521 = vmax.f32 %v1509, %v1383
        %v1522 = vmax.f32 %v1510, %v1385
        %v1523 = vmax.f32 %v1511, %v1387
        %v1524 = vmax.f32 %v1512, %v1389
        %v1525 = vmax.f32 %v1513, %v1516
        %1534 = vrot.lane.b32.xlu0 %v980, 2
        %v1535 = vpop.permute.xlu0 %1534
        %1536 = vrot.lane.b32.xlu0 %v981, 2
        %v1537 = vpop.permute.xlu0 %1536
        %1538 = vrot.lane.b32.xlu0 %v982, 2
        %v1539 = vpop.permute.xlu0 %1538
        %1540 = vrot.lane.b32.xlu0 %v983, 2
        %v1541 = vpop.permute.xlu0 %1540
        %1542 = vrot.lane.b32.xlu0 %v984, 2
        %v1543 = vpop.permute.xlu0 %1542
        %1544 = vrot.lane.b32.xlu0 %v985, 2
        %v1545 = vpop.permute.xlu0 %1544
        %1546 = vrot.lane.b32.xlu0 %v986, 2
        %v1547 = vpop.permute.xlu0 %1546
        %1548 = vrot.lane.b32.xlu0 %v987, 2
        %v1549 = vpop.permute.xlu0 %1548
        %1566 = vrot.lane.b32.xlu0 %v1124, 4
        %v1567 = vpop.permute.xlu0 %1566
        %1568 = vrot.lane.b32.xlu0 %v1125, 4
        %v1569 = vpop.permute.xlu0 %1568
        %1570 = vrot.lane.b32.xlu0 %v1126, 4
        %v1571 = vpop.permute.xlu0 %1570
        %1572 = vrot.lane.b32.xlu0 %v1127, 4
        %v1573 = vpop.permute.xlu0 %1572
        %1574 = vrot.lane.b32.xlu0 %v1128, 4
        %v1575 = vpop.permute.xlu0 %1574
        %1576 = vrot.lane.b32.xlu0 %v1129, 4
        %v1577 = vpop.permute.xlu0 %1576
        %1578 = vrot.lane.b32.xlu0 %v1130, 4
        %v1579 = vpop.permute.xlu0 %1578
        %1580 = vrot.lane.b32.xlu0 %v1131, 4
        %v1581 = vpop.permute.xlu0 %1580
        %1598 = vrot.lane.b32.xlu0 %v1157, 6
        %v1599 = vpop.permute.xlu0 %1598
        %1600 = vrot.lane.b32.xlu0 %v1158, 6
        %v1601 = vpop.permute.xlu0 %1600
        %1602 = vrot.lane.b32.xlu0 %v1159, 6
        %v1603 = vpop.permute.xlu0 %1602
        %1604 = vrot.lane.b32.xlu0 %v1160, 6
        %v1605 = vpop.permute.xlu0 %1604
        %1606 = vrot.lane.b32.xlu0 %v1161, 6
        %v1607 = vpop.permute.xlu0 %1606
        %1608 = vrot.lane.b32.xlu0 %v1162, 6
        %v1609 = vpop.permute.xlu0 %1608
        %1610 = vrot.lane.b32.xlu0 %v1163, 6
        %v1611 = vpop.permute.xlu0 %1610
        %1612 = vrot.lane.b32.xlu0 %v1164, 6
        %v1613 = vpop.permute.xlu0 %1612
        %1630 = vrot.lane.b32.xlu0 %v1070, 8
        %v1631 = vpop.permute.xlu0 %1630
        %1632 = vrot.lane.b32.xlu0 %v1071, 8
        %v1633 = vpop.permute.xlu0 %1632
        %1634 = vrot.lane.b32.xlu0 %v1072, 8
        %v1635 = vpop.permute.xlu0 %1634
        %1636 = vrot.lane.b32.xlu0 %v1073, 8
        %v1637 = vpop.permute.xlu0 %1636
        %1638 = vrot.lane.b32.xlu0 %v1074, 8
        %v1639 = vpop.permute.xlu0 %1638
        %1640 = vrot.lane.b32.xlu0 %v1075, 8
        %v1641 = vpop.permute.xlu0 %1640
        %1642 = vrot.lane.b32.xlu0 %v1076, 8
        %v1643 = vpop.permute.xlu0 %1642
        %1644 = vrot.lane.b32.xlu0 %v1077, 8
        %v1645 = vpop.permute.xlu0 %1644
        %1662 = vrot.lane.b32.xlu0 %v1165, 10
        %v1663 = vpop.permute.xlu0 %1662
        %1664 = vrot.lane.b32.xlu0 %v1166, 10
        %v1665 = vpop.permute.xlu0 %1664
        %1666 = vrot.lane.b32.xlu0 %v1167, 10
        %v1667 = vpop.permute.xlu0 %1666
        %1668 = vrot.lane.b32.xlu0 %v1168, 10
        %v1669 = vpop.permute.xlu0 %1668
        %1670 = vrot.lane.b32.xlu0 %v1169, 10
        %v1671 = vpop.permute.xlu0 %1670
        %1672 = vrot.lane.b32.xlu0 %v1170, 10
        %v1673 = vpop.permute.xlu0 %1672
        %1674 = vrot.lane.b32.xlu0 %v1171, 10
        %v1675 = vpop.permute.xlu0 %1674
        %1676 = vrot.lane.b32.xlu0 %v1172, 10
        %v1677 = vpop.permute.xlu0 %1676
        %1694 = vrot.lane.b32.xlu0 %v1115, 12
        %v1695 = vpop.permute.xlu0 %1694
        %1696 = vrot.lane.b32.xlu0 %v1116, 12
        %v1697 = vpop.permute.xlu0 %1696
        %1698 = vrot.lane.b32.xlu0 %v1117, 12
        %v1699 = vpop.permute.xlu0 %1698
        %1700 = vrot.lane.b32.xlu0 %v1118, 12
        %v1701 = vpop.permute.xlu0 %1700
        %1702 = vrot.lane.b32.xlu0 %v1119, 12
        %v1703 = vpop.permute.xlu0 %1702
        %1704 = vrot.lane.b32.xlu0 %v1120, 12
        %v1705 = vpop.permute.xlu0 %1704
        %1706 = vrot.lane.b32.xlu0 %v1121, 12
        %v1707 = vpop.permute.xlu0 %1706
        %1708 = vrot.lane.b32.xlu0 %v1122, 12
        %v1709 = vpop.permute.xlu0 %1708
        %1719 = vrot.lane.b32.xlu0 %v981, 14
        %v1720 = vpop.permute.xlu0 %1719
        %1721 = vrot.lane.b32.xlu0 %v982, 14
        %v1722 = vpop.permute.xlu0 %1721
        %1723 = vrot.lane.b32.xlu0 %v983, 14
        %v1724 = vpop.permute.xlu0 %1723
        %1725 = vrot.lane.b32.xlu0 %v984, 14
        %v1726 = vpop.permute.xlu0 %1725
        %1727 = vrot.lane.b32.xlu0 %v985, 14
        %v1728 = vpop.permute.xlu0 %1727
        %1729 = vrot.lane.b32.xlu0 %v986, 14
        %v1730 = vpop.permute.xlu0 %1729
        %1731 = vrot.lane.b32.xlu0 %v987, 14
        %v1732 = vpop.permute.xlu0 %1731
        %1733 = vrot.lane.b32.xlu0 %v988, 14
        %v1734 = vpop.permute.xlu0 %1733
        %1744 = vrot.lane.b32.xlu0 %v1125, 16
        %v1745 = vpop.permute.xlu0 %1744
        %1746 = vrot.lane.b32.xlu0 %v1126, 16
        %v1747 = vpop.permute.xlu0 %1746
        %1748 = vrot.lane.b32.xlu0 %v1127, 16
        %v1749 = vpop.permute.xlu0 %1748
        %1750 = vrot.lane.b32.xlu0 %v1128, 16
        %v1751 = vpop.permute.xlu0 %1750
        %1752 = vrot.lane.b32.xlu0 %v1129, 16
        %v1753 = vpop.permute.xlu0 %1752
        %1754 = vrot.lane.b32.xlu0 %v1130, 16
        %v1755 = vpop.permute.xlu0 %1754
        %1756 = vrot.lane.b32.xlu0 %v1131, 16
        %v1757 = vpop.permute.xlu0 %1756
        %1758 = vrot.lane.b32.xlu0 %v1132, 16
        %v1759 = vpop.permute.xlu0 %1758
        %1776 = vrot.lane.b32.xlu0 %v1518, 18
        %v1777 = vpop.permute.xlu0 %1776
        %1778 = vrot.lane.b32.xlu0 %v1519, 18
        %v1779 = vpop.permute.xlu0 %1778
        %1780 = vrot.lane.b32.xlu0 %v1520, 18
        %v1781 = vpop.permute.xlu0 %1780
        %1782 = vrot.lane.b32.xlu0 %v1521, 18
        %v1783 = vpop.permute.xlu0 %1782
        %1784 = vrot.lane.b32.xlu0 %v1522, 18
        %v1785 = vpop.permute.xlu0 %1784
        %1786 = vrot.lane.b32.xlu0 %v1523, 18
        %v1787 = vpop.permute.xlu0 %1786
        %1788 = vrot.lane.b32.xlu0 %v1524, 18
        %v1789 = vpop.permute.xlu0 %1788
        %1790 = vrot.lane.b32.xlu0 %v1525, 18
        %v1791 = vpop.permute.xlu0 %1790
        %vm1800 = vcmask 15360
        %v1801 = vsel %vm1800, %v1114, %v1535
        %v1802 = vsel %vm1800, %v1115, %v1537
        %v1803 = vsel %vm1800, %v1116, %v1539
        %v1804 = vsel %vm1800, %v1117, %v1541
        %v1805 = vsel %vm1800, %v1118, %v1543
        %v1806 = vsel %vm1800, %v1119, %v1545
        %v1807 = vsel %vm1800, %v1120, %v1547
        %v1808 = vsel %vm1800, %v1121, %v1549
        %vm1809 = vcmask 31744
        %v1810 = vsel %vm1809, %v1801, %v1567
        %v1811 = vsel %vm1809, %v1802, %v1569
        %v1812 = vsel %vm1809, %v1803, %v1571
        %v1813 = vsel %vm1809, %v1804, %v1573
        %v1814 = vsel %vm1809, %v1805, %v1575
        %v1815 = vsel %vm1809, %v1806, %v1577
        %v1816 = vsel %vm1809, %v1807, %v1579
        %v1817 = vsel %vm1809, %v1808, %v1581
        %vm1818 = vcmask 48128
        %v1819 = vsel %vm1818, %v1810, %v1599
        %v1820 = vsel %vm1818, %v1811, %v1601
        %v1821 = vsel %vm1818, %v1812, %v1603
        %v1822 = vsel %vm1818, %v1813, %v1605
        %v1823 = vsel %vm1818, %v1814, %v1607
        %v1824 = vsel %vm1818, %v1815, %v1609
        %v1825 = vsel %vm1818, %v1816, %v1611
        %v1826 = vsel %vm1818, %v1817, %v1613
        %vm1827 = vcmask 64512
        %v1828 = vsel %vm1827, %v1819, %v1631
        %v1829 = vsel %vm1827, %v1820, %v1633
        %v1830 = vsel %vm1827, %v1821, %v1635
        %v1831 = vsel %vm1827, %v1822, %v1637
        %v1832 = vsel %vm1827, %v1823, %v1639
        %v1833 = vsel %vm1827, %v1824, %v1641
        %v1834 = vsel %vm1827, %v1825, %v1643
        %v1835 = vsel %vm1827, %v1826, %v1645
        %vm1836 = vcmask 80896
        %v1837 = vsel %vm1836, %v1828, %v1663
        %v1838 = vsel %vm1836, %v1829, %v1665
        %v1839 = vsel %vm1836, %v1830, %v1667
        %v1840 = vsel %vm1836, %v1831, %v1669
        %v1841 = vsel %vm1836, %v1832, %v1671
        %v1842 = vsel %vm1836, %v1833, %v1673
        %v1843 = vsel %vm1836, %v1834, %v1675
        %v1844 = vsel %vm1836, %v1835, %v1677
        %vm1845 = vcmask 97280
        %v1846 = vsel %vm1845, %v1837, %v1695
        %v1847 = vsel %vm1845, %v1838, %v1697
        %v1848 = vsel %vm1845, %v1839, %v1699
        %v1849 = vsel %vm1845, %v1840, %v1701
        %v1850 = vsel %vm1845, %v1841, %v1703
        %v1851 = vsel %vm1845, %v1842, %v1705
        %v1852 = vsel %vm1845, %v1843, %v1707
        %v1853 = vsel %vm1845, %v1844, %v1709
        %vm1854 = vcmask 113664
        %v1855 = vsel %vm1854, %v1846, %v1720
        %v1856 = vsel %vm1854, %v1847, %v1722
        %v1857 = vsel %vm1854, %v1848, %v1724
        %v1858 = vsel %vm1854, %v1849, %v1726
        %v1859 = vsel %vm1854, %v1850, %v1728
        %v1860 = vsel %vm1854, %v1851, %v1730
        %v1861 = vsel %vm1854, %v1852, %v1732
        %v1862 = vsel %vm1854, %v1853, %v1734
        %vm1863 = vcmask 130048
        %v1864 = vsel %vm1863, %v1855, %v1745
        %v1865 = vsel %vm1863, %v1856, %v1747
        %v1866 = vsel %vm1863, %v1857, %v1749
        %v1867 = vsel %vm1863, %v1858, %v1751
        %v1868 = vsel %vm1863, %v1859, %v1753
        %v1869 = vsel %vm1863, %v1860, %v1755
        %v1870 = vsel %vm1863, %v1861, %v1757
        %v1871 = vsel %vm1863, %v1862, %v1759
        %vm1872 = vcmask 146432
        %v1873 = vsel %vm1872, %v1864, %v1777
        %v1874 = vsel %vm1872, %v1865, %v1779
        %v1875 = vsel %vm1872, %v1866, %v1781
        %v1876 = vsel %vm1872, %v1867, %v1783
        %v1877 = vsel %vm1872, %v1868, %v1785
        %v1878 = vsel %vm1872, %v1869, %v1787
        %v1879 = vsel %vm1872, %v1870, %v1789
        %v1880 = vsel %vm1872, %v1871, %v1791
        %v1881 = vld [vmem:[%s4] sm:$0xff]
        %v1882 = vld [vmem:[%s4 + $0x8] sm:$0xff]
        %v1883 = vld [vmem:[%s4 + $0x10] sm:$0xf]
        %v1884 = vld [vmem:[%s5] sm:$0x1]
        %v1886 = vlaneseq
        %v1887 = vshrl.u32 %v1886, 7
        %v1888 = vsub.s32 0, %v1887
        %v1889 = vrot.slane %v1884, %v1888
        %vm1891 = vcmask 162816
        %v1893 = vsel %vm1891, %v1873, 0
        %v1896 = vsel %vm1891, %v1874, 0
        %v1899 = vsel %vm1891, %v1875, 0
        %v1902 = vsel %vm1891, %v1876, 0
        %v1905 = vsel %vm1891, %v1877, 0
        %v1908 = vsel %vm1891, %v1878, 0
        %v1911 = vsel %vm1891, %v1879, 0
        %v1914 = vsel %vm1891, %v1880, 0
        %vm1916 = vcmask 1043456
        %v1918 = vsel %vm1916, %v1883, 0
        %1920 = vmatprep.subr.mxu0 0.0
        %1921 = vmatpush1.msra.mxu0 %v1881
        %1922 = vmatprep.subr.mxu0 0.0
        %1923 = vmatpush1.msra.mxu0 %v1882
        %1924 = vmatprep.subr.mxu0 0.0
        %1925 = vmatpush1.msra.mxu0 %v1918
        %1926 = vmatprep.subr.mxu0 0.0
        %1927 = vmatpush1.msra.mxu0 0.0
        %1928 = vmatprep.subr.mxu0 0.0
        %1929 = vmatpush1.msra.mxu0 0.0
        %1930 = vmatprep.subr.mxu0 0.0
        %1931 = vmatpush1.msra.mxu0 0.0
        %1932 = vmatprep.subr.mxu0 0.0
        %1933 = vmatpush1.msra.mxu0 0.0
        %1934 = vmatprep.subr.mxu0 0.0
        %1935 = vmatpush1.msra.mxu0 0.0
        %1936 = vmatprep.subr.mxu0 0.0
        %1937 = vmatpush1.msra.mxu0 0.0
        %1938 = vmatprep.subr.mxu0 0.0
        %1939 = vmatpush1.msra.mxu0 0.0
        %1940 = vmatprep.subr.mxu0 0.0
        %1941 = vmatpush1.msra.mxu0 0.0
        %1942 = vmatprep.subr.mxu0 0.0
        %1943 = vmatpush1.msra.mxu0 0.0
        %1944 = vmatprep.subr.mxu0 0.0
        %1945 = vmatpush1.msra.mxu0 0.0
        %1946 = vmatprep.subr.mxu0 0.0
        %1947 = vmatpush1.msra.mxu0 0.0
        %1948 = vmatprep.subr.mxu0 0.0
        %1949 = vmatpush1.msra.mxu0 0.0
        %1950 = vmatprep.subr.mxu0 0.0
        %1951 = vmatpush1.msra.mxu0 0.0
        %1952 = vmatprep.subr.mxu0 0.0
        %1953 = vmatpush1.msra.mxu0 0.0
        %1954 = vmatprep.subr.mxu0 0.0
        %1955 = vmatpush1.msra.mxu0 0.0
        %1956 = vmatprep.subr.mxu0 0.0
        %1957 = vmatpush1.msra.mxu0 0.0
        %1958 = vmatprep.subr.mxu0 0.0
        %1959 = vmatpush1.msra.mxu0 0.0
        %1960 = vmatprep.subr.mxu0 0.0
        %1961 = vmatpush1.msra.mxu0 0.0
        %1962 = vmatprep.subr.mxu0 0.0
        %1963 = vmatpush1.msra.mxu0 0.0
        %1964 = vmatprep.subr.mxu0 0.0
        %1965 = vmatpush1.msra.mxu0 0.0
        %1966 = vmatprep.subr.mxu0 0.0
        %1967 = vmatpush1.msra.mxu0 0.0
        %1968 = vmatprep.subr.mxu0 0.0
        %1969 = vmatpush1.msra.mxu0 0.0
        %1970 = vmatprep.subr.mxu0 0.0
        %1971 = vmatpush1.msra.mxu0 0.0
        %1972 = vmatprep.subr.mxu0 0.0
        %1973 = vmatpush1.msra.mxu0 0.0
        %1974 = vmatprep.subr.mxu0 0.0
        %1975 = vmatpush1.msra.mxu0 0.0
        %1976 = vmatprep.subr.mxu0 0.0
        %1977 = vmatpush1.msra.mxu0 0.0
        %1978 = vmatprep.subr.mxu0 0.0
        %1979 = vmatpush1.msra.mxu0 0.0
        %1980 = vmatprep.subr.mxu0 0.0
        %1981 = vmatpush1.msra.mxu0 0.0
        %1982 = vmatprep.subr.mxu0 0.0
        %1983 = vmatpush1.msra.mxu0 0.0
        %1984 = vmatprep.mubr.f32.mxu0 0.0
        %1985 = vmatmul.mubr.f32.gmra.mrb[0].mxu0 %v1893
        %v1986 = vpop.f32.mrb[0].mxu0
        %v1987 = vadd.f32 %v1889, %v1986
        %v1988 = vpop.f32.mrb[0].mxu0
        %1989 = vmatprep.mubr.f32.mxu0 0.0
        %1990 = vmatmul.mubr.f32.gmra.mrb[0].mxu0 %v1896
        %v1991 = vpop.f32.mrb[0].mxu0
        %v1992 = vadd.f32 %v1889, %v1991
        %v1993 = vpop.f32.mrb[0].mxu0
        %1994 = vmatprep.mubr.f32.mxu0 0.0
        %1995 = vmatmul.mubr.f32.gmra.mrb[0].mxu0 %v1899
        %v1996 = vpop.f32.mrb[0].mxu0
        %v1997 = vadd.f32 %v1889, %v1996
        %v1998 = vpop.f32.mrb[0].mxu0
        %1999 = vmatprep.mubr.f32.mxu0 0.0
        %2000 = vmatmul.mubr.f32.gmra.mrb[0].mxu0 %v1902
        %v2001 = vpop.f32.mrb[0].mxu0
        %v2002 = vadd.f32 %v1889, %v2001
        %v2003 = vpop.f32.mrb[0].mxu0
        %2004 = vmatprep.mubr.f32.mxu0 0.0
        %2005 = vmatmul.mubr.f32.gmra.mrb[0].mxu0 %v1905
        %v2006 = vpop.f32.mrb[0].mxu0
        %v2007 = vadd.f32 %v1889, %v2006
        %v2008 = vpop.f32.mrb[0].mxu0
        %2009 = vmatprep.mubr.f32.mxu0 0.0
        %2010 = vmatmul.mubr.f32.gmra.mrb[0].mxu0 %v1908
        %v2011 = vpop.f32.mrb[0].mxu0
        %v2012 = vadd.f32 %v1889, %v2011
        %v2013 = vpop.f32.mrb[0].mxu0
        %2014 = vmatprep.mubr.f32.mxu0 0.0
        %2015 = vmatmul.mubr.f32.gmra.mrb[0].mxu0 %v1911
        %v2016 = vpop.f32.mrb[0].mxu0
        %v2017 = vadd.f32 %v1889, %v2016
        %v2018 = vpop.f32.mrb[0].mxu0
        %2019 = vmatprep.mubr.f32.mxu0 0.0
        %2020 = vmatmul.mubr.f32.gmra.mrb[0].mxu0 %v1914
        %v2021 = vpop.f32.mrb[0].mxu0
        %v2022 = vadd.f32 %v1889, %v2021
        %v2023 = vpop.f32.mrb[0].mxu0
        %2024 = vdwg.mxu0
        %v2025 = vsub.f32 0.0, %v1987
        %v2026 = vsub.f32 0.0, %v1992
        %v2027 = vsub.f32 0.0, %v1997
        %v2028 = vsub.f32 0.0, %v2002
        %v2029 = vsub.f32 0.0, %v2007
        %v2030 = vsub.f32 0.0, %v2012
        %v2031 = vsub.f32 0.0, %v2017
        %v2032 = vsub.f32 0.0, %v2022
        %v2033 = vmul.f32 %v2025, 1.442695
        %v2034 = vpow.pop %v2033
        %v2035 = vmul.f32 %v2026, 1.442695
        %v2036 = vpow.pop %v2035
        %v2037 = vmul.f32 %v2027, 1.442695
        %v2038 = vpow.pop %v2037
        %v2039 = vmul.f32 %v2028, 1.442695
        %v2040 = vpow.pop %v2039
        %v2041 = vmul.f32 %v2029, 1.442695
        %v2042 = vpow.pop %v2041
        %v2043 = vmul.f32 %v2030, 1.442695
        %v2044 = vpow.pop %v2043
        %v2045 = vmul.f32 %v2031, 1.442695
        %v2046 = vpow.pop %v2045
        %v2047 = vmul.f32 %v2032, 1.442695
        %v2048 = vpow.pop %v2047
        %v2049 = vadd.f32 %v2034, 1.0
        %v2050 = vadd.f32 %v2036, 1.0
        %v2051 = vadd.f32 %v2038, 1.0
        %v2052 = vadd.f32 %v2040, 1.0
        %v2053 = vadd.f32 %v2042, 1.0
        %v2054 = vadd.f32 %v2044, 1.0
        %v2055 = vadd.f32 %v2046, 1.0
        %v2056 = vadd.f32 %v2048, 1.0
        %v2057 = vrcp.pop %v2049
        %v2058 = vrcp.pop %v2050
        %v2059 = vrcp.pop %v2051
        %v2060 = vrcp.pop %v2052
        %v2061 = vrcp.pop %v2053
        %v2062 = vrcp.pop %v2054
        %v2063 = vrcp.pop %v2055
        %v2064 = vrcp.pop %v2056
        %v2065 = vmul.f32 %v1987, %v2057
        %v2066 = vmul.f32 %v1992, %v2058
        %v2067 = vmul.f32 %v1997, %v2059
        %v2068 = vmul.f32 %v2002, %v2060
        %v2069 = vmul.f32 %v2007, %v2061
        %v2070 = vmul.f32 %v2012, %v2062
        %v2071 = vmul.f32 %v2017, %v2063
        %v2072 = vmul.f32 %v2022, %v2064
        %2073 = vst.msk [vmem:[%s637] sm:$0xff] %vm1827, %v2065
        %2074 = vst.msk [vmem:[%s637 + $0x8] sm:$0xff] %vm1827, %v2066
        %2075 = vst.msk [vmem:[%s637 + $0x10] sm:$0xff] %vm1827, %v2067
        %2076 = vst.msk [vmem:[%s637 + $0x18] sm:$0xff] %vm1827, %v2068
        %2077 = vst.msk [vmem:[%s637 + $0x20] sm:$0xff] %vm1827, %v2069
        %2078 = vst.msk [vmem:[%s637 + $0x28] sm:$0xff] %vm1827, %v2070
        %2079 = vst.msk [vmem:[%s637 + $0x30] sm:$0xff] %vm1827, %v2071
        %2080 = vst.msk [vmem:[%s637 + $0x38] sm:$0xff] %vm1827, %v2072
        %s2081 = smul.u32 8, %s22
        %p2082 = scmp.lt.s32.totalorder %s21, 1
        %s2083 = scalar_select %p2082, %s21, 1
        %p2084 = scmp.lt.s32.totalorder %s2081, 7
        %s2085 = scalar_select %p2084, %s2081, 7
        %s2086 = smul.addr %s2083, 8
        %s2087 = sadd.s32 %s2085, %s2086
        %s2088 = smul.addr %s2087, 8
        %s2089 = scalar_lea.vmem %s6, %s2088
        // Predicated region
        $region135: #{adown_forward.1} parent=125 // pred_check
          %p2090 = pneg %p203
        $region136: #{adown_forward.1} parent=125 // pred_check_branch
          %2092 = sbr.rel (%p2090) target = $region138
        $region137: #{adown_forward.1} parent=125 // pred_region
          %s2093 = smul.u32 8, %s22
        $region138: #{adown_forward.1} parent=125 // pred_fallthru
          _
      $region126: #{adown_forward.1} parent=5 // pred_fallthru
        _
      %p2094 = scmp.le.s32.totalorder 2, %s12
      // Predicated region
      $region139: #{adown_forward.1} parent=5 // pred_check
        %p2095 = pneg %p2094
      $region140: #{adown_forward.1} parent=5 // pred_check_branch
        %2097 = sbr.rel (%p2095) target = $region142
      $region141: #{adown_forward.1} parent=5 // pred_region
        %s2098 = ssub.s32 %s12, 2
        // Predicated region
        $region143: #{adown_forward.1} parent=141 // pred_check
          %p2099 = pneg %p209
        $region144: #{adown_forward.1} parent=141 // pred_check_branch
          %2101 = sbr.rel (%p2099) target = $region146
        $region145: #{adown_forward.1} parent=141 // pred_region
          %s2102 = smul.u32 8, %s24
          %p2103 = scmp.lt.s32.totalorder %s23, 1
          %s2104 = scalar_select %p2103, %s23, 1
          %p2105 = scmp.lt.s32.totalorder %s2102, 7
          %s2106 = scalar_select %p2105, %s2102, 7
          %s2107 = smul.addr %s2104, 8
          %s2108 = sadd.s32 %s2106, %s2107
          %s2109 = smul.addr %s2108, 8
          %s2110 = scalar_lea.vmem %s6, %s2109
        $region146: #{adown_forward.1} parent=141 // pred_fallthru
          _
      $region142: #{adown_forward.1} parent=5 // pred_fallthru
        _
    $region6: #{adown_forward.1} parent=1 // loop_footer
      %s16 = sadd.s32 1, %s12
    $region7: #{adown_forward.1} parent=1 // loop_footer_branch
      %11 = sbr.rel target = $region3
    $region8: #{adown_forward.1} parent=1 // loop_exit
      _

</llo_original>
